<compile_context>
chip_gen: v6e
topology: v6e:2x2x1
jax: 0.10.0
libtpu: 0.0.40
codegen_flags: <defaults>
</compile_context>

<pallas_src>
import itertools

import jax
import jax.numpy as jnp
from jax import lax
from jax.experimental import pallas as pl
from jax.experimental.pallas import tpu as pltpu

BN_EPS = 1e-5  # torch.nn.BatchNorm3d default


def _round_up(x, m):
    return ((x + m - 1) // m) * m


def _conv_stats_kernel(x_ref, w_ref, y_ref, stats_ref):
    # x_ref: [TM, 27*Cin] bf16, w_ref: [27*Cin, Cout] bf16.
    y = jnp.dot(x_ref[...], w_ref[...], preferred_element_type=jnp.float32)
    y_ref[...] = y                                                   # [TM, Cout] f32

    # Per-channel partial sum / sum-of-squares for BatchNorm, reduced over the
    # row (M) axis on the MXU via a ones-row matmul (avoids the XLU
    # sublane-reduction path), fused with the conv pass so y is only touched once.
    ones = jnp.ones((1, y.shape[0]), dtype=jnp.float32)
    s1 = jnp.dot(ones, y, preferred_element_type=jnp.float32)        # [1, Cout]
    s2 = jnp.dot(ones, y * y, preferred_element_type=jnp.float32)    # [1, Cout]
    stats_ref[...] = jnp.concatenate([s1, s2], axis=0)[None]         # [1, 2, Cout]


def _bn_relu_kernel(y_ref, scale_ref, shift_ref, o_ref):
    # BatchNorm folded to a per-channel affine (scale/shift precomputed), + ReLU.
    out = y_ref[...] * scale_ref[...] + shift_ref[...]
    o_ref[...] = jnp.maximum(out, 0.0).astype(o_ref.dtype)


def conv_bn_relu(x, weight, gamma, beta, *, tile_m=512):
    """x: [N, Cin, D, H, W] (NCDHW, like PyTorch); weight: [Cout, Cin, 3, 3, 3].

    tile_m: rows of the flattened N*D*H*W axis per grid step. 512 keeps VMEM use
    tiny on every generation (incl. v7x's 64 MiB); on v5e/v6e with 128 MiB VMEM
    2048-4096 amortizes per-step overhead better for large problems.
    """
    N, Cin, D, H, W = x.shape
    Cout = weight.shape[0]
    K = 3
    n_taps = K * K * K
    Kdim = n_taps * Cin
    M = N * D * H * W

    # ---- glue (plain JAX): layout change + im2col with taps folded into K ----
    x_ndhwc = jnp.transpose(x, (0, 2, 3, 4, 1))                      # NDHWC
    x_pad = jnp.pad(x_ndhwc, ((0, 0), (1, 1), (1, 1), (1, 1), (0, 0)))
    cols = []
    for kd, kh, kw in itertools.product(range(K), repeat=3):
        cols.append(x_pad[:, kd:kd + D, kh:kh + H, kw:kw + W, :].reshape(M, Cin))
    x_cols = jnp.concatenate(cols, axis=1).astype(jnp.bfloat16)      # [M, 27*Cin]

    # [Cout, Cin, kd, kh, kw] -> [(kd,kh,kw,Cin), Cout], matching x_cols' K order.
    w2 = jnp.transpose(weight, (2, 3, 4, 1, 0)).reshape(Kdim, Cout)
    w2 = w2.astype(jnp.bfloat16)

    # Tile / pad the row axis. Padded rows are zero -> contribute nothing to the
    # BN sums (we divide by the true M below) and are sliced off at the end.
    tm = min(tile_m, _round_up(M, 16))
    m_pad = _round_up(M, tm)
    if m_pad != M:
        x_cols = jnp.pad(x_cols, ((0, m_pad - M), (0, 0)))
    num_tiles = m_pad // tm

    cparams = pltpu.CompilerParams(
        dimension_semantics=("parallel",),
        vmem_limit_bytes=48 * 1024 * 1024,
    )

    # ---- pass 1: conv matmul + per-tile per-channel sum / sumsq ----
    y_conv, stats = pl.pallas_call(
        _conv_stats_kernel,
        out_shape=(
            jax.ShapeDtypeStruct((m_pad, Cout), jnp.float32),
            jax.ShapeDtypeStruct((num_tiles, 2, Cout), jnp.float32),
        ),
        grid_spec=pltpu.PrefetchScalarGridSpec(
            num_scalar_prefetch=0,
            grid=(num_tiles,),
            in_specs=[
                pl.BlockSpec((tm, Kdim), lambda i: (i, 0)),
                pl.BlockSpec((Kdim, Cout), lambda i: (0, 0)),
            ],
            out_specs=(
                pl.BlockSpec((tm, Cout), lambda i: (i, 0)),
                pl.BlockSpec((1, 2, Cout), lambda i: (i, 0, 0)),
            ),
        ),
        compiler_params=cparams,
    )(x_cols, w2)

    # ---- tiny global reduction over tiles -> fold BN into scale/shift ----
    totals = jnp.sum(stats, axis=0)                                  # [2, Cout]
    mean = totals[0] / M
    var = jnp.maximum(totals[1] / M - mean * mean, 0.0)              # biased batch var
    inv_std = lax.rsqrt(var + BN_EPS)
    g32 = gamma.astype(jnp.float32)
    b32 = beta.astype(jnp.float32)
    scale = (g32 * inv_std).reshape(1, Cout)
    shift = (b32 - mean * g32 * inv_std).reshape(1, Cout)

    # ---- pass 2: normalize + affine + ReLU ----
    out_flat = pl.pallas_call(
        _bn_relu_kernel,
        out_shape=jax.ShapeDtypeStruct((m_pad, Cout), x.dtype),
        grid_spec=pltpu.PrefetchScalarGridSpec(
            num_scalar_prefetch=0,
            grid=(num_tiles,),
            in_specs=[
                pl.BlockSpec((tm, Cout), lambda i: (i, 0)),
                pl.BlockSpec((1, Cout), lambda i: (0, 0)),
                pl.BlockSpec((1, Cout), lambda i: (0, 0)),
            ],
            out_specs=pl.BlockSpec((tm, Cout), lambda i: (i, 0)),
        ),
        compiler_params=cparams,
    )(y_conv, scale, shift)

    out = out_flat[:M].reshape(N, D, H, W, Cout)
    return jnp.transpose(out, (0, 4, 1, 2, 3))                       # back to NCDHW


def conv_bn_relu_reference(x, weight, gamma, beta):
    y = lax.conv_general_dilated(
        x, weight, window_strides=(1, 1, 1),
        padding=((1, 1), (1, 1), (1, 1)),
        dimension_numbers=("NCDHW", "OIDHW", "NCDHW"))
    mean = jnp.mean(y, axis=(0, 2, 3, 4), keepdims=True)
    var = jnp.mean((y - mean) ** 2, axis=(0, 2, 3, 4), keepdims=True)
    y_hat = (y - mean) / jnp.sqrt(var + BN_EPS)
    out = y_hat * gamma.reshape(1, -1, 1, 1, 1) + beta.reshape(1, -1, 1, 1, 1)
    return jnp.maximum(out, 0.0)


if __name__ == "__main__":
    N, Cin, Cout, D, H, W = 2, 4, 8, 8, 8, 8

    key = jax.random.PRNGKey(0)
    kx, kw = jax.random.split(key)

    x = jax.random.normal(kx, (N, Cin, D, H, W), dtype=jnp.float32)

    # Deterministic synthetic parameters (Conv3d kaiming-uniform-like bound;
    # BatchNorm3d defaults: gamma=1, beta=0).
    fan_in = Cin * 3 * 3 * 3
    bound = 1.0 / jnp.sqrt(jnp.float32(fan_in))
    weight = jax.random.uniform(kw, (Cout, Cin, 3, 3, 3),
                                minval=-bound, maxval=bound, dtype=jnp.float32)
    gamma = jnp.ones((Cout,), dtype=jnp.float32)
    beta = jnp.zeros((Cout,), dtype=jnp.float32)

    out = jax.jit(conv_bn_relu)(x, weight, gamma, beta)
    out = jax.block_until_ready(out)

    ref = conv_bn_relu_reference(x, weight, gamma, beta)
    assert out.shape == (N, Cout, D, H, W)
    # bf16 matmul operands => small drift vs the f32 reference; 2e-2 abs bound.
    err = float(jnp.max(jnp.abs(out - ref)))
    assert err < 2e-2, err

    print("KERNEL_OK")
</pallas_src>

<mosaic_0001>
module attributes {stable_mosaic.version = 11 : i64} {
  func.func @_conv_stats_kernel(%arg0: i32, %arg1: memref<512x108xbf16, #tpu.memory_space<vmem>>, %arg2: memref<108x8xbf16, #tpu.memory_space<vmem>>, %arg3: memref<512x8xf32, #tpu.memory_space<vmem>>, %arg4: memref<1x2x8xf32, #tpu.memory_space<vmem>>) attributes {dimension_semantics = [#tpu.dimension_semantics<parallel>], iteration_bounds = array<i64: 2>, scalar_prefetch = 0 : i64, scratch_operands = 0 : i64, tpu.core_type = #tpu.core_type<tc>, window_params = [{transform_indices = @transform_0, window_bounds = array<i64: 512, 108>}, {pipeline_mode = #tpu.pipeline_mode<synchronous>, transform_indices = @transform_1, window_bounds = array<i64: 108, 8>}, {transform_indices = @transform_2, window_bounds = array<i64: 512, 8>}, {transform_indices = @transform_3, window_bounds = array<i64: 1, 2, 8>}]} {
    %c0 = arith.constant 0 : index
    %c0_0 = arith.constant 0 : index
    %0 = vector.load %arg1[%c0, %c0_0] : memref<512x108xbf16, #tpu.memory_space<vmem>>, vector<512x108xbf16>
    %c0_1 = arith.constant 0 : index
    %c0_2 = arith.constant 0 : index
    %1 = vector.load %arg2[%c0_1, %c0_2] : memref<108x8xbf16, #tpu.memory_space<vmem>>, vector<108x8xbf16>
    %cst = arith.constant dense<0.000000e+00> : vector<512x8xf32>
    %2 = tpu.matmul %0, %1, %cst {dimension_numbers = #tpu.dot_dimension_numbers<[1], [0], [0], [1], [0, 0, 1, 1], [], []>} : vector<512x108xbf16>, vector<108x8xbf16>, vector<512x8xf32> -> vector<512x8xf32>
    %c0_3 = arith.constant 0 : index
    %c0_4 = arith.constant 0 : index
    %3 = vector.load %arg3[%c0_3, %c0_4] : memref<512x8xf32, #tpu.memory_space<vmem>>, vector<512x8xf32>
    tpu.vector_store %arg3[%c0_3, %c0_4], %2 {strides = array<i32>} : memref<512x8xf32, #tpu.memory_space<vmem>>, vector<512x8xf32>,
    %cst_5 = arith.constant 1.000000e+00 : f32
    %4 = vector.broadcast %cst_5 : f32 to vector<1x512xf32>
    %cst_6 = arith.constant dense<0.000000e+00> : vector<1x8xf32>
    %5 = tpu.matmul %4, %2, %cst_6 {dimension_numbers = #tpu.dot_dimension_numbers<[1], [0], [0], [1], [0, 0, 1, 1], [], []>} : vector<1x512xf32>, vector<512x8xf32>, vector<1x8xf32> -> vector<1x8xf32>
    %6 = arith.mulf %2, %2 : vector<512x8xf32>
    %cst_7 = arith.constant dense<0.000000e+00> : vector<1x8xf32>
    %7 = tpu.matmul %4, %6, %cst_7 {dimension_numbers = #tpu.dot_dimension_numbers<[1], [0], [0], [1], [0, 0, 1, 1], [], []>} : vector<1x512xf32>, vector<512x8xf32>, vector<1x8xf32> -> vector<1x8xf32>
    %8 = tpu.concatenate %5, %7 in 0 : vector<1x8xf32>, vector<1x8xf32> -> vector<2x8xf32>
    %9 = vector.shape_cast %8 : vector<2x8xf32> to vector<1x2x8xf32>
    %c0_8 = arith.constant 0 : index
    %c0_9 = arith.constant 0 : index
    %c0_10 = arith.constant 0 : index
    %10 = vector.load %arg4[%c0_8, %c0_9, %c0_10] : memref<1x2x8xf32, #tpu.memory_space<vmem>>, vector<1x2x8xf32>
    tpu.vector_store %arg4[%c0_8, %c0_9, %c0_10], %9 {strides = array<i32>} : memref<1x2x8xf32, #tpu.memory_space<vmem>>, vector<1x2x8xf32>,
    return
  }
  func.func @transform_0(%arg0: i32) -> (i32, i32) {
    %c0_i32 = arith.constant 0 : i32
    %c0_i32_0 = arith.constant 0 : i32
    return %arg0, %c0_i32 : i32, i32
  }
  func.func @transform_1(%arg0: i32) -> (i32, i32) {
    %c0_i32 = arith.constant 0 : i32
    %c0_i32_0 = arith.constant 0 : i32
    %c0_i32_1 = arith.constant 0 : i32
    return %c0_i32, %c0_i32_0 : i32, i32
  }
  func.func @transform_2(%arg0: i32) -> (i32, i32) {
    %c0_i32 = arith.constant 0 : i32
    %c0_i32_0 = arith.constant 0 : i32
    return %arg0, %c0_i32 : i32, i32
  }
  func.func @transform_3(%arg0: i32) -> (i32, i32, i32) {
    %c0_i32 = arith.constant 0 : i32
    %c0_i32_0 = arith.constant 0 : i32
    %c0_i32_1 = arith.constant 0 : i32
    return %arg0, %c0_i32, %c0_i32_0 : i32, i32, i32
  }
}

module attributes {stable_mosaic.version = 11 : i64} {
  func.func @_bn_relu_kernel(%arg0: i32, %arg1: memref<512x8xf32, #tpu.memory_space<vmem>>, %arg2: memref<1x8xf32, #tpu.memory_space<vmem>>, %arg3: memref<1x8xf32, #tpu.memory_space<vmem>>, %arg4: memref<512x8xf32, #tpu.memory_space<vmem>>) attributes {dimension_semantics = [#tpu.dimension_semantics<parallel>], iteration_bounds = array<i64: 2>, scalar_prefetch = 0 : i64, scratch_operands = 0 : i64, tpu.core_type = #tpu.core_type<tc>, window_params = [{transform_indices = @transform_0, window_bounds = array<i64: 512, 8>}, {pipeline_mode = #tpu.pipeline_mode<synchronous>, transform_indices = @transform_1, window_bounds = array<i64: 1, 8>}, {pipeline_mode = #tpu.pipeline_mode<synchronous>, transform_indices = @transform_2, window_bounds = array<i64: 1, 8>}, {transform_indices = @transform_3, window_bounds = array<i64: 512, 8>}]} {
    %c0 = arith.constant 0 : index
    %c0_0 = arith.constant 0 : index
    %0 = vector.load %arg1[%c0, %c0_0] : memref<512x8xf32, #tpu.memory_space<vmem>>, vector<512x8xf32>
    %c0_1 = arith.constant 0 : index
    %c0_2 = arith.constant 0 : index
    %1 = vector.load %arg2[%c0_1, %c0_2] : memref<1x8xf32, #tpu.memory_space<vmem>>, vector<1x8xf32>
    %2 = vector.broadcast %1 : vector<1x8xf32> to vector<512x8xf32>
    %3 = arith.mulf %0, %2 : vector<512x8xf32>
    %c0_3 = arith.constant 0 : index
    %c0_4 = arith.constant 0 : index
    %4 = vector.load %arg3[%c0_3, %c0_4] : memref<1x8xf32, #tpu.memory_space<vmem>>, vector<1x8xf32>
    %5 = vector.broadcast %4 : vector<1x8xf32> to vector<512x8xf32>
    %6 = arith.addf %3, %5 : vector<512x8xf32>
    %cst = arith.constant 0.000000e+00 : f32
    %7 = vector.broadcast %cst : f32 to vector<512x8xf32>
    %8 = arith.maximumf %6, %7 : vector<512x8xf32>
    %c0_5 = arith.constant 0 : index
    %c0_6 = arith.constant 0 : index
    %9 = vector.load %arg4[%c0_5, %c0_6] : memref<512x8xf32, #tpu.memory_space<vmem>>, vector<512x8xf32>
    tpu.vector_store %arg4[%c0_5, %c0_6], %8 {strides = array<i32>} : memref<512x8xf32, #tpu.memory_space<vmem>>, vector<512x8xf32>,
    return
  }
  func.func @transform_0(%arg0: i32) -> (i32, i32) {
    %c0_i32 = arith.constant 0 : i32
    %c0_i32_0 = arith.constant 0 : i32
    return %arg0, %c0_i32 : i32, i32
  }
  func.func @transform_1(%arg0: i32) -> (i32, i32) {
    %c0_i32 = arith.constant 0 : i32
    %c0_i32_0 = arith.constant 0 : i32
    %c0_i32_1 = arith.constant 0 : i32
    return %c0_i32, %c0_i32_0 : i32, i32
  }
  func.func @transform_2(%arg0: i32) -> (i32, i32) {
    %c0_i32 = arith.constant 0 : i32
    %c0_i32_0 = arith.constant 0 : i32
    %c0_i32_1 = arith.constant 0 : i32
    return %c0_i32, %c0_i32_0 : i32, i32
  }
  func.func @transform_3(%arg0: i32) -> (i32, i32) {
    %c0_i32 = arith.constant 0 : i32
    %c0_i32_0 = arith.constant 0 : i32
    return %arg0, %c0_i32 : i32, i32
  }
}

</mosaic_0001>

<llo_original>
// kernel: conv_bn_relu.3
$region0: #{conv_bn_relu.3}
  #allocation0 [shape = 'u32[]', space=smem, size = 0x4, offset = 0x4, fixed_abs, tag = 'smem constant byte address 0x4 - core index']
  #allocation1 [shape = 'u32[144,128]{1,0:T(1,128)}', space=vmem, size = 0x12000, scoped, tag = 'internal scratch']
  %s0 = inlined_call_operand.vmem [shape: f32[1024,8], index: 0, kind: input, shape index: {}]
  %s1 = inlined_call_operand.vmem [shape: f32[1,8], index: 1, kind: input, shape index: {}]
  %s2 = inlined_call_operand.vmem [shape: f32[1,8], index: 2, kind: input, shape index: {}]
  %s3 = inlined_call_operand.vmem [shape: f32[1024,8], index: 3, kind: output, shape index: {}]
  %s4 = sld [smem:[#allocation0]]
  $region45: #{conv_bn_relu.3} parent=0
    _
  %s6 = ssub.s32 1, %s4
  %s7 = scalar_select 0, %s6, %s4
  loop: start=0, step=1, limit=4
  $region2: #{conv_bn_relu.3} parent=0 // loop_pre_header
    _
  $region3: #{conv_bn_relu.3} parent=0 // loop_header
    %s9 = sphi 0, %s13
    %p10 = scmp.ge.s32.totalorder %s9, 4
    %s19 = sphi 0, %s21
    %s22 = sphi 0, %s19
    %s23 = sphi 0, %s22
    %s39 = sphi 0, %s23
    %s43 = sphi 0, %s43
    %s45 = sphi 0, %s43
    %s46 = sphi 0, %s45
    %s60 = sphi 0, %s46
    %s64 = sphi 0, %s64
    %s66 = sphi 0, %s64
    %s67 = sphi 0, %s66
    %s81 = sphi 0, %s67
    %s87 = sphi 0, %s89
    %s90 = sphi 0, %s87
    %s91 = sphi 0, %s90
    %s107 = sphi 0, %s91
  $region4: #{conv_bn_relu.3} parent=0 // loop_header_branch
    %12 = sbr.rel (%p10) target = $region8
  $region5: #{conv_bn_relu.3} parent=0 // loop_body
    %s14 = ssub.s32 %s9, 1
    %s15 = ssub.s32 %s9, 2
    %s16 = sadd.s32 %s9, 1
    %s17 = ssub.s32 %s9, %s16
    %p18 = scmp.eq.s32.totalorder %s17, 0
    %s20 = sadd.s32 %s19, 1
    %s21 = scalar_select %p18, %s19, %s20
    %p24 = pneg %p18
    %p25 = scmp.eq.s32.totalorder %s9, 1
    %p26 = por %p24, %p25
    %p27 = scmp.ne.s32.totalorder %s19, %s22
    %p28 = scmp.eq.s32.totalorder %s9, 0
    %p29 = por %p27, %p28
    %p30 = scmp.ne.s32.totalorder %s19, %s22
    %p31 = scmp.eq.s32.totalorder %s14, 1
    %p32 = por %p30, %p31
    %p33 = scmp.ne.s32.totalorder %s22, %s23
    %p34 = scmp.eq.s32.totalorder %s14, 0
    %p35 = por %p33, %p34
    %p36 = scmp.ne.s32.totalorder %s22, %s23
    %p37 = scmp.eq.s32.totalorder %s15, 1
    %p38 = por %p36, %p37
    %p40 = scmp.ne.s32.totalorder %s23, %s39
    %p41 = scmp.eq.s32.totalorder %s15, 0
    %p42 = por %p40, %p41
    %s44 = sadd.s32 %s43, 1
    %p47 = scmp.eq.s32.totalorder %s9, 1
    %p48 = scmp.ne.s32.totalorder %s43, %s45
    %p49 = scmp.eq.s32.totalorder %s9, 0
    %p50 = por %p48, %p49
    %p51 = scmp.ne.s32.totalorder %s43, %s45
    %p52 = scmp.eq.s32.totalorder %s14, 1
    %p53 = por %p51, %p52
    %p54 = scmp.ne.s32.totalorder %s45, %s46
    %p55 = scmp.eq.s32.totalorder %s14, 0
    %p56 = por %p54, %p55
    %p57 = scmp.ne.s32.totalorder %s45, %s46
    %p58 = scmp.eq.s32.totalorder %s15, 1
    %p59 = por %p57, %p58
    %p61 = scmp.ne.s32.totalorder %s46, %s60
    %p62 = scmp.eq.s32.totalorder %s15, 0
    %p63 = por %p61, %p62
    %s65 = sadd.s32 %s64, 1
    %p68 = scmp.eq.s32.totalorder %s9, 1
    %p69 = scmp.ne.s32.totalorder %s64, %s66
    %p70 = scmp.eq.s32.totalorder %s9, 0
    %p71 = por %p69, %p70
    %p72 = scmp.ne.s32.totalorder %s64, %s66
    %p73 = scmp.eq.s32.totalorder %s14, 1
    %p74 = por %p72, %p73
    %p75 = scmp.ne.s32.totalorder %s66, %s67
    %p76 = scmp.eq.s32.totalorder %s14, 0
    %p77 = por %p75, %p76
    %p78 = scmp.ne.s32.totalorder %s66, %s67
    %p79 = scmp.eq.s32.totalorder %s15, 1
    %p80 = por %p78, %p79
    %p82 = scmp.ne.s32.totalorder %s67, %s81
    %p83 = scmp.eq.s32.totalorder %s15, 0
    %p84 = por %p82, %p83
    %s85 = ssub.s32 %s9, %s16
    %p86 = scmp.eq.s32.totalorder %s85, 0
    %s88 = sadd.s32 %s87, 1
    %s89 = scalar_select %p86, %s87, %s88
    %p92 = pneg %p86
    %p93 = scmp.eq.s32.totalorder %s9, 1
    %p94 = por %p92, %p93
    %p95 = scmp.ne.s32.totalorder %s87, %s90
    %p96 = scmp.eq.s32.totalorder %s9, 0
    %p97 = por %p95, %p96
    %p98 = scmp.ne.s32.totalorder %s87, %s90
    %p99 = scmp.eq.s32.totalorder %s14, 1
    %p100 = por %p98, %p99
    %p101 = scmp.ne.s32.totalorder %s90, %s91
    %p102 = scmp.eq.s32.totalorder %s14, 0
    %p103 = por %p101, %p102
    %p104 = scmp.ne.s32.totalorder %s90, %s91
    %p105 = scmp.eq.s32.totalorder %s15, 1
    %p106 = por %p104, %p105
    %p108 = scmp.ne.s32.totalorder %s91, %s107
    %p109 = scmp.eq.s32.totalorder %s15, 0
    %p110 = por %p108, %p109
    %p111 = scmp.le.s32.totalorder 1, %s9
    %p112 = scmp.lt.s32.totalorder %s9, 3
    %p113 = pnand %p111, %p112
    %p114 = pneg %p113
    // Predicated region
    $region9: #{conv_bn_relu.3} parent=5 // pred_check
      _
    $region10: #{conv_bn_relu.3} parent=5 // pred_check_branch
      %116 = sbr.rel (%p113) target = $region12
    $region11: #{conv_bn_relu.3} parent=5 // pred_region
      %s117 = ssub.s32 %s9, 1
      // Predicated region
      $region13: #{conv_bn_relu.3} parent=11 // pred_check
        %p118 = pneg %p56
      $region14: #{conv_bn_relu.3} parent=11 // pred_check_branch
        %120 = sbr.rel (%p118) target = $region16
      $region15: #{conv_bn_relu.3} parent=11 // pred_region
        _
      $region16: #{conv_bn_relu.3} parent=11 // pred_fallthru
        _
      // Predicated region
      $region17: #{conv_bn_relu.3} parent=11 // pred_check
        %p121 = pneg %p77
      $region18: #{conv_bn_relu.3} parent=11 // pred_check_branch
        %123 = sbr.rel (%p121) target = $region20
      $region19: #{conv_bn_relu.3} parent=11 // pred_region
        _
      $region20: #{conv_bn_relu.3} parent=11 // pred_fallthru
        _
    $region12: #{conv_bn_relu.3} parent=5 // pred_fallthru
      _
    %p124 = scmp.lt.s32.totalorder %s9, 2
    // Predicated region
    $region21: #{conv_bn_relu.3} parent=5 // pred_check
      %p125 = pneg %p124
    $region22: #{conv_bn_relu.3} parent=5 // pred_check_branch
      %127 = sbr.rel (%p125) target = $region24
    $region23: #{conv_bn_relu.3} parent=5 // pred_region
      // Predicated region
      $region25: #{conv_bn_relu.3} parent=23 // pred_check
        %p128 = pneg %p29
      $region26: #{conv_bn_relu.3} parent=23 // pred_check_branch
        %130 = sbr.rel (%p128) target = $region28
      $region27: #{conv_bn_relu.3} parent=23 // pred_region
        %s131 = smul.u32 64, %s9
        %p132 = scmp.lt.s32.totalorder %s131, 127
        %s133 = scalar_select %p132, %s131, 127
        %s134 = smul.addr %s133, 8
        %s135 = scalar_lea.vmem %s0, %s134
        %s136 = smul.u32 64, %s9
      $region28: #{conv_bn_relu.3} parent=23 // pred_fallthru
        _
    $region24: #{conv_bn_relu.3} parent=5 // pred_fallthru
      _
    %p137 = scmp.le.s32.totalorder 1, %s9
    %p138 = scmp.lt.s32.totalorder %s9, 3
    %p139 = pnand %p137, %p138
    %p140 = pneg %p139
    // Predicated region
    $region29: #{conv_bn_relu.3} parent=5 // pred_check
      _
    $region30: #{conv_bn_relu.3} parent=5 // pred_check_branch
      %142 = sbr.rel (%p139) target = $region32
    $region31: #{conv_bn_relu.3} parent=5 // pred_region
      %s143 = ssub.s32 %s9, 1
      %s144 = smul.u32 64, %s14
      %p145 = scmp.lt.s32.totalorder %s144, 127
      %s146 = scalar_select %p145, %s144, 127
      %s147 = smul.addr %s146, 8
      %s148 = scalar_lea.vmem %s0, %s147
      %p149 = pneg %p35
      %p150 = pneg %p32
      %p151 = pneg %p56
      %p152 = pneg %p53
      %p153 = pneg %p77
      %p154 = pneg %p74
      %p155 = pneg %p103
      %p156 = pneg %p100
      %s157 = smul.u32 64, %s14
      %p158 = scmp.lt.s32.totalorder %s157, 127
      %s159 = scalar_select %p158, %s157, 127
      %s160 = smul.addr %s159, 8
      %s161 = scalar_lea.vmem %s3, %s160
      %s162 = smul.u32 64, %s14
      %p163 = scmp.lt.s32.totalorder %s162, 127
      %s164 = scalar_select %p163, %s162, 127
      %s165 = smul.addr %s164, 8
      %s166 = scalar_lea.vmem %s0, %s165
      %s167 = smul.u32 64, %s14
      %s168 = smul.u32 64, %s14
      %p169 = scmp.lt.s32.totalorder %s168, 127
      %s170 = scalar_select %p169, %s168, 127
      %s171 = smul.addr %s170, 8
      %s172 = scalar_lea.vmem %s3, %s171
      %s173 = smul.u32 64, %s14
      %v174 = vld [vmem:[%s166] sm:$0xff]
      %v175 = vld [vmem:[%s166 + $0x8] sm:$0xff]
      %v176 = vld [vmem:[%s166 + $0x10] sm:$0xff]
      %v177 = vld [vmem:[%s166 + $0x18] sm:$0xff]
      %v178 = vld [vmem:[%s166 + $0x20] sm:$0xff]
      %v179 = vld [vmem:[%s166 + $0x28] sm:$0xff]
      %v180 = vld [vmem:[%s166 + $0x30] sm:$0xff]
      %v181 = vld [vmem:[%s166 + $0x38] sm:$0xff]
      %v182 = vld [vmem:[%s166 + $0x40] sm:$0xff]
      %v183 = vld [vmem:[%s166 + $0x48] sm:$0xff]
      %v184 = vld [vmem:[%s166 + $0x50] sm:$0xff]
      %v185 = vld [vmem:[%s166 + $0x58] sm:$0xff]
      %v186 = vld [vmem:[%s166 + $0x60] sm:$0xff]
      %v187 = vld [vmem:[%s166 + $0x68] sm:$0xff]
      %v188 = vld [vmem:[%s166 + $0x70] sm:$0xff]
      %v189 = vld [vmem:[%s166 + $0x78] sm:$0xff]
      %v190 = vld [vmem:[%s166 + $0x80] sm:$0xff]
      %v191 = vld [vmem:[%s166 + $0x88] sm:$0xff]
      %v192 = vld [vmem:[%s166 + $0x90] sm:$0xff]
      %v193 = vld [vmem:[%s166 + $0x98] sm:$0xff]
      %v194 = vld [vmem:[%s166 + $0xa0] sm:$0xff]
      %v195 = vld [vmem:[%s166 + $0xa8] sm:$0xff]
      %v196 = vld [vmem:[%s166 + $0xb0] sm:$0xff]
      %v197 = vld [vmem:[%s166 + $0xb8] sm:$0xff]
      %v198 = vld [vmem:[%s166 + $0xc0] sm:$0xff]
      %v199 = vld [vmem:[%s166 + $0xc8] sm:$0xff]
      %v200 = vld [vmem:[%s166 + $0xd0] sm:$0xff]
      %v201 = vld [vmem:[%s166 + $0xd8] sm:$0xff]
      %v202 = vld [vmem:[%s166 + $0xe0] sm:$0xff]
      %v203 = vld [vmem:[%s166 + $0xe8] sm:$0xff]
      %v204 = vld [vmem:[%s166 + $0xf0] sm:$0xff]
      %v205 = vld [vmem:[%s166 + $0xf8] sm:$0xff]
      %v206 = vld [vmem:[%s166 + $0x100] sm:$0xff]
      %v207 = vld [vmem:[%s166 + $0x108] sm:$0xff]
      %v208 = vld [vmem:[%s166 + $0x110] sm:$0xff]
      %v209 = vld [vmem:[%s166 + $0x118] sm:$0xff]
      %v210 = vld [vmem:[%s166 + $0x120] sm:$0xff]
      %v211 = vld [vmem:[%s166 + $0x128] sm:$0xff]
      %v212 = vld [vmem:[%s166 + $0x130] sm:$0xff]
      %v213 = vld [vmem:[%s166 + $0x138] sm:$0xff]
      %v214 = vld [vmem:[%s166 + $0x140] sm:$0xff]
      %v215 = vld [vmem:[%s166 + $0x148] sm:$0xff]
      %v216 = vld [vmem:[%s166 + $0x150] sm:$0xff]
      %v217 = vld [vmem:[%s166 + $0x158] sm:$0xff]
      %v218 = vld [vmem:[%s166 + $0x160] sm:$0xff]
      %v219 = vld [vmem:[%s166 + $0x168] sm:$0xff]
      %v220 = vld [vmem:[%s166 + $0x170] sm:$0xff]
      %v221 = vld [vmem:[%s166 + $0x178] sm:$0xff]
      %v222 = vld [vmem:[%s166 + $0x180] sm:$0xff]
      %v223 = vld [vmem:[%s166 + $0x188] sm:$0xff]
      %v224 = vld [vmem:[%s166 + $0x190] sm:$0xff]
      %v225 = vld [vmem:[%s166 + $0x198] sm:$0xff]
      %v226 = vld [vmem:[%s166 + $0x1a0] sm:$0xff]
      %v227 = vld [vmem:[%s166 + $0x1a8] sm:$0xff]
      %v228 = vld [vmem:[%s166 + $0x1b0] sm:$0xff]
      %v229 = vld [vmem:[%s166 + $0x1b8] sm:$0xff]
      %v230 = vld [vmem:[%s166 + $0x1c0] sm:$0xff]
      %v231 = vld [vmem:[%s166 + $0x1c8] sm:$0xff]
      %v232 = vld [vmem:[%s166 + $0x1d0] sm:$0xff]
      %v233 = vld [vmem:[%s166 + $0x1d8] sm:$0xff]
      %v234 = vld [vmem:[%s166 + $0x1e0] sm:$0xff]
      %v235 = vld [vmem:[%s166 + $0x1e8] sm:$0xff]
      %v236 = vld [vmem:[%s166 + $0x1f0] sm:$0xff]
      %v237 = vld [vmem:[%s166 + $0x1f8] sm:$0xff]
      %v238 = vld [vmem:[%s1] sm:$0x1]
      %v240 = vlaneseq
      %v241 = vshrl.u32 %v240, 7
      %v242 = vsub.s32 0, %v241
      %v243 = vrot.slane %v238, %v242
      %v245 = vmul.f32 %v174, %v243
      %v246 = vmul.f32 %v175, %v243
      %v247 = vmul.f32 %v176, %v243
      %v248 = vmul.f32 %v177, %v243
      %v249 = vmul.f32 %v178, %v243
      %v250 = vmul.f32 %v179, %v243
      %v251 = vmul.f32 %v180, %v243
      %v252 = vmul.f32 %v181, %v243
      %v253 = vmul.f32 %v182, %v243
      %v254 = vmul.f32 %v183, %v243
      %v255 = vmul.f32 %v184, %v243
      %v256 = vmul.f32 %v185, %v243
      %v257 = vmul.f32 %v186, %v243
      %v258 = vmul.f32 %v187, %v243
      %v259 = vmul.f32 %v188, %v243
      %v260 = vmul.f32 %v189, %v243
      %v261 = vmul.f32 %v190, %v243
      %v262 = vmul.f32 %v191, %v243
      %v263 = vmul.f32 %v192, %v243
      %v264 = vmul.f32 %v193, %v243
      %v265 = vmul.f32 %v194, %v243
      %v266 = vmul.f32 %v195, %v243
      %v267 = vmul.f32 %v196, %v243
      %v268 = vmul.f32 %v197, %v243
      %v269 = vmul.f32 %v198, %v243
      %v270 = vmul.f32 %v199, %v243
      %v271 = vmul.f32 %v200, %v243
      %v272 = vmul.f32 %v201, %v243
      %v273 = vmul.f32 %v202, %v243
      %v274 = vmul.f32 %v203, %v243
      %v275 = vmul.f32 %v204, %v243
      %v276 = vmul.f32 %v205, %v243
      %v277 = vmul.f32 %v206, %v243
      %v278 = vmul.f32 %v207, %v243
      %v279 = vmul.f32 %v208, %v243
      %v280 = vmul.f32 %v209, %v243
      %v281 = vmul.f32 %v210, %v243
      %v282 = vmul.f32 %v211, %v243
      %v283 = vmul.f32 %v212, %v243
      %v284 = vmul.f32 %v213, %v243
      %v285 = vmul.f32 %v214, %v243
      %v286 = vmul.f32 %v215, %v243
      %v287 = vmul.f32 %v216, %v243
      %v288 = vmul.f32 %v217, %v243
      %v289 = vmul.f32 %v218, %v243
      %v290 = vmul.f32 %v219, %v243
      %v291 = vmul.f32 %v220, %v243
      %v292 = vmul.f32 %v221, %v243
      %v293 = vmul.f32 %v222, %v243
      %v294 = vmul.f32 %v223, %v243
      %v295 = vmul.f32 %v224, %v243
      %v296 = vmul.f32 %v225, %v243
      %v297 = vmul.f32 %v226, %v243
      %v298 = vmul.f32 %v227, %v243
      %v299 = vmul.f32 %v228, %v243
      %v300 = vmul.f32 %v229, %v243
      %v301 = vmul.f32 %v230, %v243
      %v302 = vmul.f32 %v231, %v243
      %v303 = vmul.f32 %v232, %v243
      %v304 = vmul.f32 %v233, %v243
      %v305 = vmul.f32 %v234, %v243
      %v306 = vmul.f32 %v235, %v243
      %v307 = vmul.f32 %v236, %v243
      %v308 = vmul.f32 %v237, %v243
      %v309 = vld [vmem:[%s2] sm:$0x1]
      %v311 = vlaneseq
      %v312 = vshrl.u32 %v311, 7
      %v313 = vsub.s32 0, %v312
      %v314 = vrot.slane %v309, %v313
      %v316 = vadd.f32 %v245, %v314
      %v317 = vadd.f32 %v246, %v314
      %v318 = vadd.f32 %v247, %v314
      %v319 = vadd.f32 %v248, %v314
      %v320 = vadd.f32 %v249, %v314
      %v321 = vadd.f32 %v250, %v314
      %v322 = vadd.f32 %v251, %v314
      %v323 = vadd.f32 %v252, %v314
      %v324 = vadd.f32 %v253, %v314
      %v325 = vadd.f32 %v254, %v314
      %v326 = vadd.f32 %v255, %v314
      %v327 = vadd.f32 %v256, %v314
      %v328 = vadd.f32 %v257, %v314
      %v329 = vadd.f32 %v258, %v314
      %v330 = vadd.f32 %v259, %v314
      %v331 = vadd.f32 %v260, %v314
      %v332 = vadd.f32 %v261, %v314
      %v333 = vadd.f32 %v262, %v314
      %v334 = vadd.f32 %v263, %v314
      %v335 = vadd.f32 %v264, %v314
      %v336 = vadd.f32 %v265, %v314
      %v337 = vadd.f32 %v266, %v314
      %v338 = vadd.f32 %v267, %v314
      %v339 = vadd.f32 %v268, %v314
      %v340 = vadd.f32 %v269, %v314
      %v341 = vadd.f32 %v270, %v314
      %v342 = vadd.f32 %v271, %v314
      %v343 = vadd.f32 %v272, %v314
      %v344 = vadd.f32 %v273, %v314
      %v345 = vadd.f32 %v274, %v314
      %v346 = vadd.f32 %v275, %v314
      %v347 = vadd.f32 %v276, %v314
      %v348 = vadd.f32 %v277, %v314
      %v349 = vadd.f32 %v278, %v314
      %v350 = vadd.f32 %v279, %v314
      %v351 = vadd.f32 %v280, %v314
      %v352 = vadd.f32 %v281, %v314
      %v353 = vadd.f32 %v282, %v314
      %v354 = vadd.f32 %v283, %v314
      %v355 = vadd.f32 %v284, %v314
      %v356 = vadd.f32 %v285, %v314
      %v357 = vadd.f32 %v286, %v314
      %v358 = vadd.f32 %v287, %v314
      %v359 = vadd.f32 %v288, %v314
      %v360 = vadd.f32 %v289, %v314
      %v361 = vadd.f32 %v290, %v314
      %v362 = vadd.f32 %v291, %v314
      %v363 = vadd.f32 %v292, %v314
      %v364 = vadd.f32 %v293, %v314
      %v365 = vadd.f32 %v294, %v314
      %v366 = vadd.f32 %v295, %v314
      %v367 = vadd.f32 %v296, %v314
      %v368 = vadd.f32 %v297, %v314
      %v369 = vadd.f32 %v298, %v314
      %v370 = vadd.f32 %v299, %v314
      %v371 = vadd.f32 %v300, %v314
      %v372 = vadd.f32 %v301, %v314
      %v373 = vadd.f32 %v302, %v314
      %v374 = vadd.f32 %v303, %v314
      %v375 = vadd.f32 %v304, %v314
      %v376 = vadd.f32 %v305, %v314
      %v377 = vadd.f32 %v306, %v314
      %v378 = vadd.f32 %v307, %v314
      %v379 = vadd.f32 %v308, %v314
      %v380 = vmax.f32 %v316, 0.0
      %v381 = vmax.f32 %v317, 0.0
      %v382 = vmax.f32 %v318, 0.0
      %v383 = vmax.f32 %v319, 0.0
      %v384 = vmax.f32 %v320, 0.0
      %v385 = vmax.f32 %v321, 0.0
      %v386 = vmax.f32 %v322, 0.0
      %v387 = vmax.f32 %v323, 0.0
      %v388 = vmax.f32 %v324, 0.0
      %v389 = vmax.f32 %v325, 0.0
      %v390 = vmax.f32 %v326, 0.0
      %v391 = vmax.f32 %v327, 0.0
      %v392 = vmax.f32 %v328, 0.0
      %v393 = vmax.f32 %v329, 0.0
      %v394 = vmax.f32 %v330, 0.0
      %v395 = vmax.f32 %v331, 0.0
      %v396 = vmax.f32 %v332, 0.0
      %v397 = vmax.f32 %v333, 0.0
      %v398 = vmax.f32 %v334, 0.0
      %v399 = vmax.f32 %v335, 0.0
      %v400 = vmax.f32 %v336, 0.0
      %v401 = vmax.f32 %v337, 0.0
      %v402 = vmax.f32 %v338, 0.0
      %v403 = vmax.f32 %v339, 0.0
      %v404 = vmax.f32 %v340, 0.0
      %v405 = vmax.f32 %v341, 0.0
      %v406 = vmax.f32 %v342, 0.0
      %v407 = vmax.f32 %v343, 0.0
      %v408 = vmax.f32 %v344, 0.0
      %v409 = vmax.f32 %v345, 0.0
      %v410 = vmax.f32 %v346, 0.0
      %v411 = vmax.f32 %v347, 0.0
      %v412 = vmax.f32 %v348, 0.0
      %v413 = vmax.f32 %v349, 0.0
      %v414 = vmax.f32 %v350, 0.0
      %v415 = vmax.f32 %v351, 0.0
      %v416 = vmax.f32 %v352, 0.0
      %v417 = vmax.f32 %v353, 0.0
      %v418 = vmax.f32 %v354, 0.0
      %v419 = vmax.f32 %v355, 0.0
      %v420 = vmax.f32 %v356, 0.0
      %v421 = vmax.f32 %v357, 0.0
      %v422 = vmax.f32 %v358, 0.0
      %v423 = vmax.f32 %v359, 0.0
      %v424 = vmax.f32 %v360, 0.0
      %v425 = vmax.f32 %v361, 0.0
      %v426 = vmax.f32 %v362, 0.0
      %v427 = vmax.f32 %v363, 0.0
      %v428 = vmax.f32 %v364, 0.0
      %v429 = vmax.f32 %v365, 0.0
      %v430 = vmax.f32 %v366, 0.0
      %v431 = vmax.f32 %v367, 0.0
      %v432 = vmax.f32 %v368, 0.0
      %v433 = vmax.f32 %v369, 0.0
      %v434 = vmax.f32 %v370, 0.0
      %v435 = vmax.f32 %v371, 0.0
      %v436 = vmax.f32 %v372, 0.0
      %v437 = vmax.f32 %v373, 0.0
      %v438 = vmax.f32 %v374, 0.0
      %v439 = vmax.f32 %v375, 0.0
      %v440 = vmax.f32 %v376, 0.0
      %v441 = vmax.f32 %v377, 0.0
      %v442 = vmax.f32 %v378, 0.0
      %v443 = vmax.f32 %v379, 0.0
      %vm444 = vcmask 64512
      %445 = vst.msk [vmem:[%s172] sm:$0xff] %vm444, %v380
      %446 = vst.msk [vmem:[%s172 + $0x8] sm:$0xff] %vm444, %v381
      %447 = vst.msk [vmem:[%s172 + $0x10] sm:$0xff] %vm444, %v382
      %448 = vst.msk [vmem:[%s172 + $0x18] sm:$0xff] %vm444, %v383
      %449 = vst.msk [vmem:[%s172 + $0x20] sm:$0xff] %vm444, %v384
      %450 = vst.msk [vmem:[%s172 + $0x28] sm:$0xff] %vm444, %v385
      %451 = vst.msk [vmem:[%s172 + $0x30] sm:$0xff] %vm444, %v386
      %452 = vst.msk [vmem:[%s172 + $0x38] sm:$0xff] %vm444, %v387
      %453 = vst.msk [vmem:[%s172 + $0x40] sm:$0xff] %vm444, %v388
      %454 = vst.msk [vmem:[%s172 + $0x48] sm:$0xff] %vm444, %v389
      %455 = vst.msk [vmem:[%s172 + $0x50] sm:$0xff] %vm444, %v390
      %456 = vst.msk [vmem:[%s172 + $0x58] sm:$0xff] %vm444, %v391
      %457 = vst.msk [vmem:[%s172 + $0x60] sm:$0xff] %vm444, %v392
      %458 = vst.msk [vmem:[%s172 + $0x68] sm:$0xff] %vm444, %v393
      %459 = vst.msk [vmem:[%s172 + $0x70] sm:$0xff] %vm444, %v394
      %460 = vst.msk [vmem:[%s172 + $0x78] sm:$0xff] %vm444, %v395
      %461 = vst.msk [vmem:[%s172 + $0x80] sm:$0xff] %vm444, %v396
      %462 = vst.msk [vmem:[%s172 + $0x88] sm:$0xff] %vm444, %v397
      %463 = vst.msk [vmem:[%s172 + $0x90] sm:$0xff] %vm444, %v398
      %464 = vst.msk [vmem:[%s172 + $0x98] sm:$0xff] %vm444, %v399
      %465 = vst.msk [vmem:[%s172 + $0xa0] sm:$0xff] %vm444, %v400
      %466 = vst.msk [vmem:[%s172 + $0xa8] sm:$0xff] %vm444, %v401
      %467 = vst.msk [vmem:[%s172 + $0xb0] sm:$0xff] %vm444, %v402
      %468 = vst.msk [vmem:[%s172 + $0xb8] sm:$0xff] %vm444, %v403
      %469 = vst.msk [vmem:[%s172 + $0xc0] sm:$0xff] %vm444, %v404
      %470 = vst.msk [vmem:[%s172 + $0xc8] sm:$0xff] %vm444, %v405
      %471 = vst.msk [vmem:[%s172 + $0xd0] sm:$0xff] %vm444, %v406
      %472 = vst.msk [vmem:[%s172 + $0xd8] sm:$0xff] %vm444, %v407
      %473 = vst.msk [vmem:[%s172 + $0xe0] sm:$0xff] %vm444, %v408
      %474 = vst.msk [vmem:[%s172 + $0xe8] sm:$0xff] %vm444, %v409
      %475 = vst.msk [vmem:[%s172 + $0xf0] sm:$0xff] %vm444, %v410
      %476 = vst.msk [vmem:[%s172 + $0xf8] sm:$0xff] %vm444, %v411
      %477 = vst.msk [vmem:[%s172 + $0x100] sm:$0xff] %vm444, %v412
      %478 = vst.msk [vmem:[%s172 + $0x108] sm:$0xff] %vm444, %v413
      %479 = vst.msk [vmem:[%s172 + $0x110] sm:$0xff] %vm444, %v414
      %480 = vst.msk [vmem:[%s172 + $0x118] sm:$0xff] %vm444, %v415
      %481 = vst.msk [vmem:[%s172 + $0x120] sm:$0xff] %vm444, %v416
      %482 = vst.msk [vmem:[%s172 + $0x128] sm:$0xff] %vm444, %v417
      %483 = vst.msk [vmem:[%s172 + $0x130] sm:$0xff] %vm444, %v418
      %484 = vst.msk [vmem:[%s172 + $0x138] sm:$0xff] %vm444, %v419
      %485 = vst.msk [vmem:[%s172 + $0x140] sm:$0xff] %vm444, %v420
      %486 = vst.msk [vmem:[%s172 + $0x148] sm:$0xff] %vm444, %v421
      %487 = vst.msk [vmem:[%s172 + $0x150] sm:$0xff] %vm444, %v422
      %488 = vst.msk [vmem:[%s172 + $0x158] sm:$0xff] %vm444, %v423
      %489 = vst.msk [vmem:[%s172 + $0x160] sm:$0xff] %vm444, %v424
      %490 = vst.msk [vmem:[%s172 + $0x168] sm:$0xff] %vm444, %v425
      %491 = vst.msk [vmem:[%s172 + $0x170] sm:$0xff] %vm444, %v426
      %492 = vst.msk [vmem:[%s172 + $0x178] sm:$0xff] %vm444, %v427
      %493 = vst.msk [vmem:[%s172 + $0x180] sm:$0xff] %vm444, %v428
      %494 = vst.msk [vmem:[%s172 + $0x188] sm:$0xff] %vm444, %v429
      %495 = vst.msk [vmem:[%s172 + $0x190] sm:$0xff] %vm444, %v430
      %496 = vst.msk [vmem:[%s172 + $0x198] sm:$0xff] %vm444, %v431
      %497 = vst.msk [vmem:[%s172 + $0x1a0] sm:$0xff] %vm444, %v432
      %498 = vst.msk [vmem:[%s172 + $0x1a8] sm:$0xff] %vm444, %v433
      %499 = vst.msk [vmem:[%s172 + $0x1b0] sm:$0xff] %vm444, %v434
      %500 = vst.msk [vmem:[%s172 + $0x1b8] sm:$0xff] %vm444, %v435
      %501 = vst.msk [vmem:[%s172 + $0x1c0] sm:$0xff] %vm444, %v436
      %502 = vst.msk [vmem:[%s172 + $0x1c8] sm:$0xff] %vm444, %v437
      %503 = vst.msk [vmem:[%s172 + $0x1d0] sm:$0xff] %vm444, %v438
      %504 = vst.msk [vmem:[%s172 + $0x1d8] sm:$0xff] %vm444, %v439
      %505 = vst.msk [vmem:[%s172 + $0x1e0] sm:$0xff] %vm444, %v440
      %506 = vst.msk [vmem:[%s172 + $0x1e8] sm:$0xff] %vm444, %v441
      %507 = vst.msk [vmem:[%s172 + $0x1f0] sm:$0xff] %vm444, %v442
      %508 = vst.msk [vmem:[%s172 + $0x1f8] sm:$0xff] %vm444, %v443
      %s509 = smul.u32 64, %s14
      %p510 = scmp.lt.s32.totalorder %s509, 127
      %s511 = scalar_select %p510, %s509, 127
      %s512 = smul.addr %s511, 8
      %s513 = scalar_lea.vmem %s3, %s512
      // Predicated region
      $region33: #{conv_bn_relu.3} parent=31 // pred_check
        %p514 = pneg %p100
      $region34: #{conv_bn_relu.3} parent=31 // pred_check_branch
        %516 = sbr.rel (%p514) target = $region36
      $region35: #{conv_bn_relu.3} parent=31 // pred_region
        %s517 = smul.u32 64, %s14
      $region36: #{conv_bn_relu.3} parent=31 // pred_fallthru
        _
    $region32: #{conv_bn_relu.3} parent=5 // pred_fallthru
      _
    %p518 = scmp.le.s32.totalorder 2, %s9
    // Predicated region
    $region37: #{conv_bn_relu.3} parent=5 // pred_check
      %p519 = pneg %p518
    $region38: #{conv_bn_relu.3} parent=5 // pred_check_branch
      %521 = sbr.rel (%p519) target = $region40
    $region39: #{conv_bn_relu.3} parent=5 // pred_region
      %s522 = ssub.s32 %s9, 2
      // Predicated region
      $region41: #{conv_bn_relu.3} parent=39 // pred_check
        %p523 = pneg %p106
      $region42: #{conv_bn_relu.3} parent=39 // pred_check_branch
        %525 = sbr.rel (%p523) target = $region44
      $region43: #{conv_bn_relu.3} parent=39 // pred_region
        %s526 = smul.u32 64, %s15
        %p527 = scmp.lt.s32.totalorder %s526, 127
        %s528 = scalar_select %p527, %s526, 127
        %s529 = smul.addr %s528, 8
        %s530 = scalar_lea.vmem %s3, %s529
      $region44: #{conv_bn_relu.3} parent=39 // pred_fallthru
        _
    $region40: #{conv_bn_relu.3} parent=5 // pred_fallthru
      _
  $region6: #{conv_bn_relu.3} parent=0 // loop_footer
    %s13 = sadd.s32 1, %s9
  $region7: #{conv_bn_relu.3} parent=0 // loop_footer_branch
    %8 = sbr.rel target = $region3
  $region8: #{conv_bn_relu.3} parent=0 // loop_exit
    _

// kernel: conv_bn_relu.2
$region0: #{conv_bn_relu.2}
  #allocation0 [shape = 'u32[]', space=smem, size = 0x4, offset = 0x4, fixed_abs, tag = 'smem constant byte address 0x4 - core index']
  #allocation1 [shape = 'u32[144,128]{1,0:T(1,128)}', space=vmem, size = 0x12000, scoped, tag = 'internal scratch']
  %s0 = inlined_call_operand.vmem [shape: bf16[1024,108], index: 0, kind: input, shape index: {}]
  %s1 = inlined_call_operand.vmem [shape: bf16[108,8], index: 1, kind: input, shape index: {}]
  %s2 = inlined_call_operand.vmem [shape: f32[1024,8], index: 2, kind: output, shape index: {0}]
  %s3 = inlined_call_operand.vmem [shape: f32[2,2,8], index: 3, kind: output, shape index: {1}]
  %4 = xla_tuple %s2, %s3
  %s5 = sld [smem:[#allocation0]]
  $region49: #{conv_bn_relu.2} parent=0
    _
  %s7 = ssub.s32 1, %s5
  %s8 = scalar_select 0, %s7, %s5
  loop: start=0, step=1, limit=4
  $region2: #{conv_bn_relu.2} parent=0 // loop_pre_header
    _
  $region3: #{conv_bn_relu.2} parent=0 // loop_header
    %s10 = sphi 0, %s14
    %p11 = scmp.ge.s32.totalorder %s10, 4
    %s20 = sphi 0, %s22
    %s23 = sphi 0, %s20
    %s24 = sphi 0, %s23
    %s40 = sphi 0, %s24
    %s44 = sphi 0, %s44
    %s46 = sphi 0, %s44
    %s47 = sphi 0, %s46
    %s61 = sphi 0, %s47
    %s67 = sphi 0, %s69
    %s70 = sphi 0, %s67
    %s71 = sphi 0, %s70
    %s87 = sphi 0, %s71
    %s93 = sphi 0, %s95
    %s96 = sphi 0, %s93
    %s97 = sphi 0, %s96
    %s113 = sphi 0, %s97
  $region4: #{conv_bn_relu.2} parent=0 // loop_header_branch
    %13 = sbr.rel (%p11) target = $region8
  $region5: #{conv_bn_relu.2} parent=0 // loop_body
    %s15 = ssub.s32 %s10, 1
    %s16 = ssub.s32 %s10, 2
    %s17 = sadd.s32 %s10, 1
    %s18 = ssub.s32 %s10, %s17
    %p19 = scmp.eq.s32.totalorder %s18, 0
    %s21 = sadd.s32 %s20, 1
    %s22 = scalar_select %p19, %s20, %s21
    %p25 = pneg %p19
    %p26 = scmp.eq.s32.totalorder %s10, 1
    %p27 = por %p25, %p26
    %p28 = scmp.ne.s32.totalorder %s20, %s23
    %p29 = scmp.eq.s32.totalorder %s10, 0
    %p30 = por %p28, %p29
    %p31 = scmp.ne.s32.totalorder %s20, %s23
    %p32 = scmp.eq.s32.totalorder %s15, 1
    %p33 = por %p31, %p32
    %p34 = scmp.ne.s32.totalorder %s23, %s24
    %p35 = scmp.eq.s32.totalorder %s15, 0
    %p36 = por %p34, %p35
    %p37 = scmp.ne.s32.totalorder %s23, %s24
    %p38 = scmp.eq.s32.totalorder %s16, 1
    %p39 = por %p37, %p38
    %p41 = scmp.ne.s32.totalorder %s24, %s40
    %p42 = scmp.eq.s32.totalorder %s16, 0
    %p43 = por %p41, %p42
    %s45 = sadd.s32 %s44, 1
    %p48 = scmp.eq.s32.totalorder %s10, 1
    %p49 = scmp.ne.s32.totalorder %s44, %s46
    %p50 = scmp.eq.s32.totalorder %s10, 0
    %p51 = por %p49, %p50
    %p52 = scmp.ne.s32.totalorder %s44, %s46
    %p53 = scmp.eq.s32.totalorder %s15, 1
    %p54 = por %p52, %p53
    %p55 = scmp.ne.s32.totalorder %s46, %s47
    %p56 = scmp.eq.s32.totalorder %s15, 0
    %p57 = por %p55, %p56
    %p58 = scmp.ne.s32.totalorder %s46, %s47
    %p59 = scmp.eq.s32.totalorder %s16, 1
    %p60 = por %p58, %p59
    %p62 = scmp.ne.s32.totalorder %s47, %s61
    %p63 = scmp.eq.s32.totalorder %s16, 0
    %p64 = por %p62, %p63
    %s65 = ssub.s32 %s10, %s17
    %p66 = scmp.eq.s32.totalorder %s65, 0
    %s68 = sadd.s32 %s67, 1
    %s69 = scalar_select %p66, %s67, %s68
    %p72 = pneg %p66
    %p73 = scmp.eq.s32.totalorder %s10, 1
    %p74 = por %p72, %p73
    %p75 = scmp.ne.s32.totalorder %s67, %s70
    %p76 = scmp.eq.s32.totalorder %s10, 0
    %p77 = por %p75, %p76
    %p78 = scmp.ne.s32.totalorder %s67, %s70
    %p79 = scmp.eq.s32.totalorder %s15, 1
    %p80 = por %p78, %p79
    %p81 = scmp.ne.s32.totalorder %s70, %s71
    %p82 = scmp.eq.s32.totalorder %s15, 0
    %p83 = por %p81, %p82
    %p84 = scmp.ne.s32.totalorder %s70, %s71
    %p85 = scmp.eq.s32.totalorder %s16, 1
    %p86 = por %p84, %p85
    %p88 = scmp.ne.s32.totalorder %s71, %s87
    %p89 = scmp.eq.s32.totalorder %s16, 0
    %p90 = por %p88, %p89
    %s91 = ssub.s32 %s10, %s17
    %p92 = scmp.eq.s32.totalorder %s91, 0
    %s94 = sadd.s32 %s93, 1
    %s95 = scalar_select %p92, %s93, %s94
    %p98 = pneg %p92
    %p99 = scmp.eq.s32.totalorder %s10, 1
    %p100 = por %p98, %p99
    %p101 = scmp.ne.s32.totalorder %s93, %s96
    %p102 = scmp.eq.s32.totalorder %s10, 0
    %p103 = por %p101, %p102
    %p104 = scmp.ne.s32.totalorder %s93, %s96
    %p105 = scmp.eq.s32.totalorder %s15, 1
    %p106 = por %p104, %p105
    %p107 = scmp.ne.s32.totalorder %s96, %s97
    %p108 = scmp.eq.s32.totalorder %s15, 0
    %p109 = por %p107, %p108
    %p110 = scmp.ne.s32.totalorder %s96, %s97
    %p111 = scmp.eq.s32.totalorder %s16, 1
    %p112 = por %p110, %p111
    %p114 = scmp.ne.s32.totalorder %s97, %s113
    %p115 = scmp.eq.s32.totalorder %s16, 0
    %p116 = por %p114, %p115
    %p117 = scmp.le.s32.totalorder 1, %s10
    %p118 = scmp.lt.s32.totalorder %s10, 3
    %p119 = pnand %p117, %p118
    %p120 = pneg %p119
    // Predicated region
    $region9: #{conv_bn_relu.2} parent=5 // pred_check
      _
    $region10: #{conv_bn_relu.2} parent=5 // pred_check_branch
      %122 = sbr.rel (%p119) target = $region12
    $region11: #{conv_bn_relu.2} parent=5 // pred_region
      %s123 = ssub.s32 %s10, 1
      // Predicated region
      $region13: #{conv_bn_relu.2} parent=11 // pred_check
        %p124 = pneg %p57
      $region14: #{conv_bn_relu.2} parent=11 // pred_check_branch
        %126 = sbr.rel (%p124) target = $region16
      $region15: #{conv_bn_relu.2} parent=11 // pred_region
        _
      $region16: #{conv_bn_relu.2} parent=11 // pred_fallthru
        _
    $region12: #{conv_bn_relu.2} parent=5 // pred_fallthru
      _
    %p127 = scmp.lt.s32.totalorder %s10, 2
    // Predicated region
    $region17: #{conv_bn_relu.2} parent=5 // pred_check
      %p128 = pneg %p127
    $region18: #{conv_bn_relu.2} parent=5 // pred_check_branch
      %130 = sbr.rel (%p128) target = $region20
    $region19: #{conv_bn_relu.2} parent=5 // pred_region
      // Predicated region
      $region21: #{conv_bn_relu.2} parent=19 // pred_check
        %p131 = pneg %p30
      $region22: #{conv_bn_relu.2} parent=19 // pred_check_branch
        %133 = sbr.rel (%p131) target = $region24
      $region23: #{conv_bn_relu.2} parent=19 // pred_region
        %s134 = smul.u32 64, %s10
        %p135 = scmp.lt.s32.totalorder %s134, 127
        %s136 = scalar_select %p135, %s134, 127
        %s137 = smul.addr %s136, 4
        %s138 = scalar_lea.vmem %s0, %s137
        %s139 = smul.u32 64, %s10
      $region24: #{conv_bn_relu.2} parent=19 // pred_fallthru
        _
    $region20: #{conv_bn_relu.2} parent=5 // pred_fallthru
      _
    %p140 = scmp.le.s32.totalorder 1, %s10
    %p141 = scmp.lt.s32.totalorder %s10, 3
    %p142 = pnand %p140, %p141
    %p143 = pneg %p142
    // Predicated region
    $region25: #{conv_bn_relu.2} parent=5 // pred_check
      _
    $region26: #{conv_bn_relu.2} parent=5 // pred_check_branch
      %145 = sbr.rel (%p142) target = $region28
    $region27: #{conv_bn_relu.2} parent=5 // pred_region
      %s146 = ssub.s32 %s10, 1
      %s147 = smul.u32 64, %s15
      %p148 = scmp.lt.s32.totalorder %s147, 127
      %s149 = scalar_select %p148, %s147, 127
      %s150 = smul.addr %s149, 4
      %s151 = scalar_lea.vmem %s0, %s150
      %p152 = pneg %p36
      %p153 = pneg %p33
      %p154 = pneg %p57
      %p155 = pneg %p54
      %p156 = pneg %p83
      %p157 = pneg %p80
      %s158 = smul.u32 64, %s15
      %p159 = scmp.lt.s32.totalorder %s158, 127
      %s160 = scalar_select %p159, %s158, 127
      %s161 = smul.addr %s160, 8
      %s162 = scalar_lea.vmem %s2, %s161
      %p163 = pneg %p109
      %p164 = pneg %p106
      %p165 = scmp.lt.s32.totalorder %s15, 1
      %s166 = scalar_select %p165, %s15, 1
      %s167 = smul.addr %s166, 2
      %s168 = scalar_lea.vmem %s3, %s167
      %s169 = smul.u32 64, %s15
      %p170 = scmp.lt.s32.totalorder %s169, 127
      %s171 = scalar_select %p170, %s169, 127
      %s172 = smul.addr %s171, 4
      %s173 = scalar_lea.vmem %s0, %s172
      %s174 = smul.u32 64, %s15
      %s175 = smul.u32 64, %s15
      %p176 = scmp.lt.s32.totalorder %s175, 127
      %s177 = scalar_select %p176, %s175, 127
      %s178 = smul.addr %s177, 8
      %s179 = scalar_lea.vmem %s2, %s178
      %s180 = smul.u32 64, %s15
      %p181 = scmp.lt.s32.totalorder %s15, 1
      %s182 = scalar_select %p181, %s15, 1
      %s183 = smul.addr %s182, 2
      %s184 = scalar_lea.vmem %s3, %s183
      %v186 = vld [vmem:[%s173] sm:$0xf]
      %v187 = vld [vmem:[%s173 + $0x4] sm:$0xf]
      %v188 = vld [vmem:[%s173 + $0x8] sm:$0xf]
      %v189 = vld [vmem:[%s173 + $0xc] sm:$0xf]
      %v190 = vld [vmem:[%s173 + $0x10] sm:$0xf]
      %v191 = vld [vmem:[%s173 + $0x14] sm:$0xf]
      %v192 = vld [vmem:[%s173 + $0x18] sm:$0xf]
      %v193 = vld [vmem:[%s173 + $0x1c] sm:$0xf]
      %v194 = vld [vmem:[%s173 + $0x20] sm:$0xf]
      %v195 = vld [vmem:[%s173 + $0x24] sm:$0xf]
      %v196 = vld [vmem:[%s173 + $0x28] sm:$0xf]
      %v197 = vld [vmem:[%s173 + $0x2c] sm:$0xf]
      %v198 = vld [vmem:[%s173 + $0x30] sm:$0xf]
      %v199 = vld [vmem:[%s173 + $0x34] sm:$0xf]
      %v200 = vld [vmem:[%s173 + $0x38] sm:$0xf]
      %v201 = vld [vmem:[%s173 + $0x3c] sm:$0xf]
      %v202 = vld [vmem:[%s173 + $0x40] sm:$0xf]
      %v203 = vld [vmem:[%s173 + $0x44] sm:$0xf]
      %v204 = vld [vmem:[%s173 + $0x48] sm:$0xf]
      %v205 = vld [vmem:[%s173 + $0x4c] sm:$0xf]
      %v206 = vld [vmem:[%s173 + $0x50] sm:$0xf]
      %v207 = vld [vmem:[%s173 + $0x54] sm:$0xf]
      %v208 = vld [vmem:[%s173 + $0x58] sm:$0xf]
      %v209 = vld [vmem:[%s173 + $0x5c] sm:$0xf]
      %v210 = vld [vmem:[%s173 + $0x60] sm:$0xf]
      %v211 = vld [vmem:[%s173 + $0x64] sm:$0xf]
      %v212 = vld [vmem:[%s173 + $0x68] sm:$0xf]
      %v213 = vld [vmem:[%s173 + $0x6c] sm:$0xf]
      %v214 = vld [vmem:[%s173 + $0x70] sm:$0xf]
      %v215 = vld [vmem:[%s173 + $0x74] sm:$0xf]
      %v216 = vld [vmem:[%s173 + $0x78] sm:$0xf]
      %v217 = vld [vmem:[%s173 + $0x7c] sm:$0xf]
      %v218 = vld [vmem:[%s173 + $0x80] sm:$0xf]
      %v219 = vld [vmem:[%s173 + $0x84] sm:$0xf]
      %v220 = vld [vmem:[%s173 + $0x88] sm:$0xf]
      %v221 = vld [vmem:[%s173 + $0x8c] sm:$0xf]
      %v222 = vld [vmem:[%s173 + $0x90] sm:$0xf]
      %v223 = vld [vmem:[%s173 + $0x94] sm:$0xf]
      %v224 = vld [vmem:[%s173 + $0x98] sm:$0xf]
      %v225 = vld [vmem:[%s173 + $0x9c] sm:$0xf]
      %v226 = vld [vmem:[%s173 + $0xa0] sm:$0xf]
      %v227 = vld [vmem:[%s173 + $0xa4] sm:$0xf]
      %v228 = vld [vmem:[%s173 + $0xa8] sm:$0xf]
      %v229 = vld [vmem:[%s173 + $0xac] sm:$0xf]
      %v230 = vld [vmem:[%s173 + $0xb0] sm:$0xf]
      %v231 = vld [vmem:[%s173 + $0xb4] sm:$0xf]
      %v232 = vld [vmem:[%s173 + $0xb8] sm:$0xf]
      %v233 = vld [vmem:[%s173 + $0xbc] sm:$0xf]
      %v234 = vld [vmem:[%s173 + $0xc0] sm:$0xf]
      %v235 = vld [vmem:[%s173 + $0xc4] sm:$0xf]
      %v236 = vld [vmem:[%s173 + $0xc8] sm:$0xf]
      %v237 = vld [vmem:[%s173 + $0xcc] sm:$0xf]
      %v238 = vld [vmem:[%s173 + $0xd0] sm:$0xf]
      %v239 = vld [vmem:[%s173 + $0xd4] sm:$0xf]
      %v240 = vld [vmem:[%s173 + $0xd8] sm:$0xf]
      %v241 = vld [vmem:[%s173 + $0xdc] sm:$0xf]
      %v242 = vld [vmem:[%s173 + $0xe0] sm:$0xf]
      %v243 = vld [vmem:[%s173 + $0xe4] sm:$0xf]
      %v244 = vld [vmem:[%s173 + $0xe8] sm:$0xf]
      %v245 = vld [vmem:[%s173 + $0xec] sm:$0xf]
      %v246 = vld [vmem:[%s173 + $0xf0] sm:$0xf]
      %v247 = vld [vmem:[%s173 + $0xf4] sm:$0xf]
      %v248 = vld [vmem:[%s173 + $0xf8] sm:$0xf]
      %v249 = vld [vmem:[%s173 + $0xfc] sm:$0xf]
      %v250 = vld [vmem:[%s1] sm:$0xf]
      %v251 = vld [vmem:[%s1 + $0x4] sm:$0xf]
      %v252 = vld [vmem:[%s1 + $0x8] sm:$0xf]
      %v253 = vld [vmem:[%s1 + $0xc] sm:$0xf]
      %v254 = vld [vmem:[%s1 + $0x10] sm:$0xf]
      %v255 = vld [vmem:[%s1 + $0x14] sm:$0xf]
      %v256 = vld [vmem:[%s1 + $0x18] sm:$0xf]
      %v257 = vld [vmem:[%s1 + $0x1c] sm:$0xf]
      %v258 = vld [vmem:[%s1 + $0x20] sm:$0xf]
      %v259 = vld [vmem:[%s1 + $0x24] sm:$0xf]
      %v260 = vld [vmem:[%s1 + $0x28] sm:$0xf]
      %v261 = vld [vmem:[%s1 + $0x2c] sm:$0xf]
      %v262 = vld [vmem:[%s1 + $0x30] sm:$0xf]
      %v263 = vld [vmem:[%s1 + $0x34] sm:$0x3]
      %v328 = vunpack.c.l.b16 %v186
      %v329 = vunpack.c.l.b16 %v187
      %v330 = vunpack.c.l.b16 %v188
      %v331 = vunpack.c.l.b16 %v189
      %v332 = vunpack.c.l.b16 %v190
      %v333 = vunpack.c.l.b16 %v191
      %v334 = vunpack.c.l.b16 %v192
      %v335 = vunpack.c.l.b16 %v193
      %v336 = vunpack.c.l.b16 %v194
      %v337 = vunpack.c.l.b16 %v195
      %v338 = vunpack.c.l.b16 %v196
      %v339 = vunpack.c.l.b16 %v197
      %v340 = vunpack.c.l.b16 %v198
      %v341 = vunpack.c.l.b16 %v199
      %v342 = vunpack.c.l.b16 %v200
      %v343 = vunpack.c.l.b16 %v201
      %v344 = vunpack.c.l.b16 %v202
      %v345 = vunpack.c.l.b16 %v203
      %v346 = vunpack.c.l.b16 %v204
      %v347 = vunpack.c.l.b16 %v205
      %v348 = vunpack.c.l.b16 %v206
      %v349 = vunpack.c.l.b16 %v207
      %v350 = vunpack.c.l.b16 %v208
      %v351 = vunpack.c.l.b16 %v209
      %v352 = vunpack.c.l.b16 %v210
      %v353 = vunpack.c.l.b16 %v211
      %v354 = vunpack.c.l.b16 %v212
      %v355 = vunpack.c.l.b16 %v213
      %v356 = vunpack.c.l.b16 %v214
      %v357 = vunpack.c.l.b16 %v215
      %v358 = vunpack.c.l.b16 %v216
      %v359 = vunpack.c.l.b16 %v217
      %v360 = vunpack.c.l.b16 %v218
      %v361 = vunpack.c.l.b16 %v219
      %v362 = vunpack.c.l.b16 %v220
      %v363 = vunpack.c.l.b16 %v221
      %v364 = vunpack.c.l.b16 %v222
      %v365 = vunpack.c.l.b16 %v223
      %v366 = vunpack.c.l.b16 %v224
      %v367 = vunpack.c.l.b16 %v225
      %v368 = vunpack.c.l.b16 %v226
      %v369 = vunpack.c.l.b16 %v227
      %v370 = vunpack.c.l.b16 %v228
      %v371 = vunpack.c.l.b16 %v229
      %v372 = vunpack.c.l.b16 %v230
      %v373 = vunpack.c.l.b16 %v231
      %v374 = vunpack.c.l.b16 %v232
      %v375 = vunpack.c.l.b16 %v233
      %v376 = vunpack.c.l.b16 %v234
      %v377 = vunpack.c.l.b16 %v235
      %v378 = vunpack.c.l.b16 %v236
      %v379 = vunpack.c.l.b16 %v237
      %v380 = vunpack.c.l.b16 %v238
      %v381 = vunpack.c.l.b16 %v239
      %v382 = vunpack.c.l.b16 %v240
      %v383 = vunpack.c.l.b16 %v241
      %v384 = vunpack.c.l.b16 %v242
      %v385 = vunpack.c.l.b16 %v243
      %v386 = vunpack.c.l.b16 %v244
      %v387 = vunpack.c.l.b16 %v245
      %v388 = vunpack.c.l.b16 %v246
      %v389 = vunpack.c.l.b16 %v247
      %v390 = vunpack.c.l.b16 %v248
      %v391 = vunpack.c.l.b16 %v249
      %v392 = vpack.c.b16 %v329, %v328
      %v393 = vpack.c.b16 %v331, %v330
      %v394 = vpack.c.b16 %v333, %v332
      %v395 = vpack.c.b16 %v335, %v334
      %v396 = vpack.c.b16 %v337, %v336
      %v397 = vpack.c.b16 %v339, %v338
      %v398 = vpack.c.b16 %v341, %v340
      %v399 = vpack.c.b16 %v343, %v342
      %v400 = vpack.c.b16 %v345, %v344
      %v401 = vpack.c.b16 %v347, %v346
      %v402 = vpack.c.b16 %v349, %v348
      %v403 = vpack.c.b16 %v351, %v350
      %v404 = vpack.c.b16 %v353, %v352
      %v405 = vpack.c.b16 %v355, %v354
      %v406 = vpack.c.b16 %v357, %v356
      %v407 = vpack.c.b16 %v359, %v358
      %v408 = vpack.c.b16 %v361, %v360
      %v409 = vpack.c.b16 %v363, %v362
      %v410 = vpack.c.b16 %v365, %v364
      %v411 = vpack.c.b16 %v367, %v366
      %v412 = vpack.c.b16 %v369, %v368
      %v413 = vpack.c.b16 %v371, %v370
      %v414 = vpack.c.b16 %v373, %v372
      %v415 = vpack.c.b16 %v375, %v374
      %v416 = vpack.c.b16 %v377, %v376
      %v417 = vpack.c.b16 %v379, %v378
      %v418 = vpack.c.b16 %v381, %v380
      %v419 = vpack.c.b16 %v383, %v382
      %v420 = vpack.c.b16 %v385, %v384
      %v421 = vpack.c.b16 %v387, %v386
      %v422 = vpack.c.b16 %v389, %v388
      %v423 = vpack.c.b16 %v391, %v390
      %v438 = vunpack.c.l.b16 %v250
      %v439 = vunpack.c.l.b16 %v251
      %v440 = vunpack.c.l.b16 %v252
      %v441 = vunpack.c.l.b16 %v253
      %v442 = vunpack.c.l.b16 %v254
      %v443 = vunpack.c.l.b16 %v255
      %v444 = vunpack.c.l.b16 %v256
      %v445 = vunpack.c.l.b16 %v257
      %v446 = vunpack.c.l.b16 %v258
      %v447 = vunpack.c.l.b16 %v259
      %v448 = vunpack.c.l.b16 %v260
      %v449 = vunpack.c.l.b16 %v261
      %v450 = vunpack.c.l.b16 %v262
      %v451 = vunpack.c.l.b16 %v263
      %v452 = vpack.c.b16 %v439, %v438
      %v453 = vpack.c.b16 %v441, %v440
      %v454 = vpack.c.b16 %v443, %v442
      %v455 = vpack.c.b16 %v445, %v444
      %v456 = vpack.c.b16 %v447, %v446
      %v457 = vpack.c.b16 %v449, %v448
      %v458 = vpack.c.b16 %v451, %v450
      %vm465 = vcmask 883712
      %v467 = vsel %vm465, %v392, 0
      %v470 = vsel %vm465, %v393, 0
      %v473 = vsel %vm465, %v394, 0
      %v476 = vsel %vm465, %v395, 0
      %v479 = vsel %vm465, %v396, 0
      %v482 = vsel %vm465, %v397, 0
      %v485 = vsel %vm465, %v398, 0
      %v488 = vsel %vm465, %v399, 0
      %v491 = vsel %vm465, %v400, 0
      %v494 = vsel %vm465, %v401, 0
      %v497 = vsel %vm465, %v402, 0
      %v500 = vsel %vm465, %v403, 0
      %v503 = vsel %vm465, %v404, 0
      %v506 = vsel %vm465, %v405, 0
      %v509 = vsel %vm465, %v406, 0
      %v512 = vsel %vm465, %v407, 0
      %v515 = vsel %vm465, %v408, 0
      %v518 = vsel %vm465, %v409, 0
      %v521 = vsel %vm465, %v410, 0
      %v524 = vsel %vm465, %v411, 0
      %v527 = vsel %vm465, %v412, 0
      %v530 = vsel %vm465, %v413, 0
      %v533 = vsel %vm465, %v414, 0
      %v536 = vsel %vm465, %v415, 0
      %v539 = vsel %vm465, %v416, 0
      %v542 = vsel %vm465, %v417, 0
      %v545 = vsel %vm465, %v418, 0
      %v548 = vsel %vm465, %v419, 0
      %v551 = vsel %vm465, %v420, 0
      %v554 = vsel %vm465, %v421, 0
      %v557 = vsel %vm465, %v422, 0
      %v560 = vsel %vm465, %v423, 0
      %vm562 = vcmask 1045504
      %v564 = vsel %vm562, %v458, 0
      %566 = vmatprep.subr.bf16.mxu0 0
      %567 = vmatpush1.bf16.msra.mxu0 0
      %568 = vmatprep.subr.bf16.mxu0 0
      %569 = vmatpush1.bf16.msra.mxu0 %v564
      %570 = vmatprep.subr.bf16.mxu0 0
      %571 = vmatpush1.bf16.msra.mxu0 %v457
      %572 = vmatprep.subr.bf16.mxu0 0
      %573 = vmatpush1.bf16.msra.mxu0 %v456
      %574 = vmatprep.subr.bf16.mxu0 0
      %575 = vmatpush1.bf16.msra.mxu0 %v455
      %576 = vmatprep.subr.bf16.mxu0 0
      %577 = vmatpush1.bf16.msra.mxu0 %v454
      %578 = vmatprep.subr.bf16.mxu0 0
      %579 = vmatpush1.bf16.msra.mxu0 %v453
      %580 = vmatprep.subr.bf16.mxu0 0
      %581 = vmatpush1.bf16.msra.mxu0 %v452
      %582 = vmatprep.subr.bf16.mxu0 0
      %583 = vmatpush2.bf16.msra.mxu0 0
      %584 = vmatprep.subr.bf16.mxu0 0
      %585 = vmatpush2.bf16.msra.mxu0 0
      %586 = vmatprep.subr.bf16.mxu0 0
      %587 = vmatpush2.bf16.msra.mxu0 0
      %588 = vmatprep.subr.bf16.mxu0 0
      %589 = vmatpush2.bf16.msra.mxu0 0
      %590 = vmatprep.subr.bf16.mxu0 0
      %591 = vmatpush2.bf16.msra.mxu0 0
      %592 = vmatprep.subr.bf16.mxu0 0
      %593 = vmatpush2.bf16.msra.mxu0 0
      %594 = vmatprep.subr.bf16.mxu0 0
      %595 = vmatpush2.bf16.msra.mxu0 0
      %596 = vmatprep.subr.bf16.mxu0 0
      %597 = vmatpush2.bf16.msra.mxu0 0
      %598 = vmatprep.mubr.bf16.mxu0 0
      %599 = vmatmul.mubr.bf16.gmra.mxu0 %v467
      %v600 = vpop.f32.mrf.mxu0
      %v601 = vadd.f32 0.0, %v600
      %v602 = vpop.f32.mrf.mxu0
      %v603 = vpop.f32.mrf.mxu0
      %v604 = vadd.f32 0.0, %v603
      %v605 = vpop.f32.mrf.mxu0
      %606 = vmatprep.mubr.bf16.mxu0 0
      %607 = vmatmul.mubr.bf16.gmra.mxu0 %v470
      %v608 = vpop.f32.mrf.mxu0
      %v609 = vadd.f32 0.0, %v608
      %v610 = vpop.f32.mrf.mxu0
      %v611 = vpop.f32.mrf.mxu0
      %v612 = vadd.f32 0.0, %v611
      %v613 = vpop.f32.mrf.mxu0
      %614 = vmatprep.mubr.bf16.mxu0 0
      %615 = vmatmul.mubr.bf16.gmra.mxu0 %v473
      %v616 = vpop.f32.mrf.mxu0
      %v617 = vadd.f32 0.0, %v616
      %v618 = vpop.f32.mrf.mxu0
      %v619 = vpop.f32.mrf.mxu0
      %v620 = vadd.f32 0.0, %v619
      %v621 = vpop.f32.mrf.mxu0
      %622 = vmatprep.mubr.bf16.mxu0 0
      %623 = vmatmul.mubr.bf16.gmra.mxu0 %v476
      %v624 = vpop.f32.mrf.mxu0
      %v625 = vadd.f32 0.0, %v624
      %v626 = vpop.f32.mrf.mxu0
      %v627 = vpop.f32.mrf.mxu0
      %v628 = vadd.f32 0.0, %v627
      %v629 = vpop.f32.mrf.mxu0
      %630 = vmatprep.mubr.bf16.mxu0 0
      %631 = vmatmul.mubr.bf16.gmra.mxu0 %v479
      %v632 = vpop.f32.mrf.mxu0
      %v633 = vadd.f32 0.0, %v632
      %v634 = vpop.f32.mrf.mxu0
      %v635 = vpop.f32.mrf.mxu0
      %v636 = vadd.f32 0.0, %v635
      %v637 = vpop.f32.mrf.mxu0
      %638 = vmatprep.mubr.bf16.mxu0 0
      %639 = vmatmul.mubr.bf16.gmra.mxu0 %v482
      %v640 = vpop.f32.mrf.mxu0
      %v641 = vadd.f32 0.0, %v640
      %v642 = vpop.f32.mrf.mxu0
      %v643 = vpop.f32.mrf.mxu0
      %v644 = vadd.f32 0.0, %v643
      %v645 = vpop.f32.mrf.mxu0
      %646 = vmatprep.mubr.bf16.mxu0 0
      %647 = vmatmul.mubr.bf16.gmra.mxu0 %v485
      %v648 = vpop.f32.mrf.mxu0
      %v649 = vadd.f32 0.0, %v648
      %v650 = vpop.f32.mrf.mxu0
      %v651 = vpop.f32.mrf.mxu0
      %v652 = vadd.f32 0.0, %v651
      %v653 = vpop.f32.mrf.mxu0
      %654 = vmatprep.mubr.bf16.mxu0 0
      %655 = vmatmul.mubr.bf16.gmra.mxu0 %v488
      %v656 = vpop.f32.mrf.mxu0
      %v657 = vadd.f32 0.0, %v656
      %v658 = vpop.f32.mrf.mxu0
      %v659 = vpop.f32.mrf.mxu0
      %v660 = vadd.f32 0.0, %v659
      %v661 = vpop.f32.mrf.mxu0
      %662 = vmatprep.mubr.bf16.mxu0 0
      %663 = vmatmul.mubr.bf16.gmra.mxu0 %v491
      %v664 = vpop.f32.mrf.mxu0
      %v665 = vadd.f32 0.0, %v664
      %v666 = vpop.f32.mrf.mxu0
      %v667 = vpop.f32.mrf.mxu0
      %v668 = vadd.f32 0.0, %v667
      %v669 = vpop.f32.mrf.mxu0
      %670 = vmatprep.mubr.bf16.mxu0 0
      %671 = vmatmul.mubr.bf16.gmra.mxu0 %v494
      %v672 = vpop.f32.mrf.mxu0
      %v673 = vadd.f32 0.0, %v672
      %v674 = vpop.f32.mrf.mxu0
      %v675 = vpop.f32.mrf.mxu0
      %v676 = vadd.f32 0.0, %v675
      %v677 = vpop.f32.mrf.mxu0
      %678 = vmatprep.mubr.bf16.mxu0 0
      %679 = vmatmul.mubr.bf16.gmra.mxu0 %v497
      %v680 = vpop.f32.mrf.mxu0
      %v681 = vadd.f32 0.0, %v680
      %v682 = vpop.f32.mrf.mxu0
      %v683 = vpop.f32.mrf.mxu0
      %v684 = vadd.f32 0.0, %v683
      %v685 = vpop.f32.mrf.mxu0
      %686 = vmatprep.mubr.bf16.mxu0 0
      %687 = vmatmul.mubr.bf16.gmra.mxu0 %v500
      %v688 = vpop.f32.mrf.mxu0
      %v689 = vadd.f32 0.0, %v688
      %v690 = vpop.f32.mrf.mxu0
      %v691 = vpop.f32.mrf.mxu0
      %v692 = vadd.f32 0.0, %v691
      %v693 = vpop.f32.mrf.mxu0
      %694 = vmatprep.mubr.bf16.mxu0 0
      %695 = vmatmul.mubr.bf16.gmra.mxu0 %v503
      %v696 = vpop.f32.mrf.mxu0
      %v697 = vadd.f32 0.0, %v696
      %v698 = vpop.f32.mrf.mxu0
      %v699 = vpop.f32.mrf.mxu0
      %v700 = vadd.f32 0.0, %v699
      %v701 = vpop.f32.mrf.mxu0
      %702 = vmatprep.mubr.bf16.mxu0 0
      %703 = vmatmul.mubr.bf16.gmra.mxu0 %v506
      %v704 = vpop.f32.mrf.mxu0
      %v705 = vadd.f32 0.0, %v704
      %v706 = vpop.f32.mrf.mxu0
      %v707 = vpop.f32.mrf.mxu0
      %v708 = vadd.f32 0.0, %v707
      %v709 = vpop.f32.mrf.mxu0
      %710 = vmatprep.mubr.bf16.mxu0 0
      %711 = vmatmul.mubr.bf16.gmra.mxu0 %v509
      %v712 = vpop.f32.mrf.mxu0
      %v713 = vadd.f32 0.0, %v712
      %v714 = vpop.f32.mrf.mxu0
      %v715 = vpop.f32.mrf.mxu0
      %v716 = vadd.f32 0.0, %v715
      %v717 = vpop.f32.mrf.mxu0
      %718 = vmatprep.mubr.bf16.mxu0 0
      %719 = vmatmul.mubr.bf16.gmra.mxu0 %v512
      %v720 = vpop.f32.mrf.mxu0
      %v721 = vadd.f32 0.0, %v720
      %v722 = vpop.f32.mrf.mxu0
      %v723 = vpop.f32.mrf.mxu0
      %v724 = vadd.f32 0.0, %v723
      %v725 = vpop.f32.mrf.mxu0
      %726 = vmatprep.mubr.bf16.mxu0 0
      %727 = vmatmul.mubr.bf16.gmra.mxu0 %v515
      %v728 = vpop.f32.mrf.mxu0
      %v729 = vadd.f32 0.0, %v728
      %v730 = vpop.f32.mrf.mxu0
      %v731 = vpop.f32.mrf.mxu0
      %v732 = vadd.f32 0.0, %v731
      %v733 = vpop.f32.mrf.mxu0
      %734 = vmatprep.mubr.bf16.mxu0 0
      %735 = vmatmul.mubr.bf16.gmra.mxu0 %v518
      %v736 = vpop.f32.mrf.mxu0
      %v737 = vadd.f32 0.0, %v736
      %v738 = vpop.f32.mrf.mxu0
      %v739 = vpop.f32.mrf.mxu0
      %v740 = vadd.f32 0.0, %v739
      %v741 = vpop.f32.mrf.mxu0
      %742 = vmatprep.mubr.bf16.mxu0 0
      %743 = vmatmul.mubr.bf16.gmra.mxu0 %v521
      %v744 = vpop.f32.mrf.mxu0
      %v745 = vadd.f32 0.0, %v744
      %v746 = vpop.f32.mrf.mxu0
      %v747 = vpop.f32.mrf.mxu0
      %v748 = vadd.f32 0.0, %v747
      %v749 = vpop.f32.mrf.mxu0
      %750 = vmatprep.mubr.bf16.mxu0 0
      %751 = vmatmul.mubr.bf16.gmra.mxu0 %v524
      %v752 = vpop.f32.mrf.mxu0
      %v753 = vadd.f32 0.0, %v752
      %v754 = vpop.f32.mrf.mxu0
      %v755 = vpop.f32.mrf.mxu0
      %v756 = vadd.f32 0.0, %v755
      %v757 = vpop.f32.mrf.mxu0
      %758 = vmatprep.mubr.bf16.mxu0 0
      %759 = vmatmul.mubr.bf16.gmra.mxu0 %v527
      %v760 = vpop.f32.mrf.mxu0
      %v761 = vadd.f32 0.0, %v760
      %v762 = vpop.f32.mrf.mxu0
      %v763 = vpop.f32.mrf.mxu0
      %v764 = vadd.f32 0.0, %v763
      %v765 = vpop.f32.mrf.mxu0
      %766 = vmatprep.mubr.bf16.mxu0 0
      %767 = vmatmul.mubr.bf16.gmra.mxu0 %v530
      %v768 = vpop.f32.mrf.mxu0
      %v769 = vadd.f32 0.0, %v768
      %v770 = vpop.f32.mrf.mxu0
      %v771 = vpop.f32.mrf.mxu0
      %v772 = vadd.f32 0.0, %v771
      %v773 = vpop.f32.mrf.mxu0
      %774 = vmatprep.mubr.bf16.mxu0 0
      %775 = vmatmul.mubr.bf16.gmra.mxu0 %v533
      %v776 = vpop.f32.mrf.mxu0
      %v777 = vadd.f32 0.0, %v776
      %v778 = vpop.f32.mrf.mxu0
      %v779 = vpop.f32.mrf.mxu0
      %v780 = vadd.f32 0.0, %v779
      %v781 = vpop.f32.mrf.mxu0
      %782 = vmatprep.mubr.bf16.mxu0 0
      %783 = vmatmul.mubr.bf16.gmra.mxu0 %v536
      %v784 = vpop.f32.mrf.mxu0
      %v785 = vadd.f32 0.0, %v784
      %v786 = vpop.f32.mrf.mxu0
      %v787 = vpop.f32.mrf.mxu0
      %v788 = vadd.f32 0.0, %v787
      %v789 = vpop.f32.mrf.mxu0
      %790 = vmatprep.mubr.bf16.mxu0 0
      %791 = vmatmul.mubr.bf16.gmra.mxu0 %v539
      %v792 = vpop.f32.mrf.mxu0
      %v793 = vadd.f32 0.0, %v792
      %v794 = vpop.f32.mrf.mxu0
      %v795 = vpop.f32.mrf.mxu0
      %v796 = vadd.f32 0.0, %v795
      %v797 = vpop.f32.mrf.mxu0
      %798 = vmatprep.mubr.bf16.mxu0 0
      %799 = vmatmul.mubr.bf16.gmra.mxu0 %v542
      %v800 = vpop.f32.mrf.mxu0
      %v801 = vadd.f32 0.0, %v800
      %v802 = vpop.f32.mrf.mxu0
      %v803 = vpop.f32.mrf.mxu0
      %v804 = vadd.f32 0.0, %v803
      %v805 = vpop.f32.mrf.mxu0
      %806 = vmatprep.mubr.bf16.mxu0 0
      %807 = vmatmul.mubr.bf16.gmra.mxu0 %v545
      %v808 = vpop.f32.mrf.mxu0
      %v809 = vadd.f32 0.0, %v808
      %v810 = vpop.f32.mrf.mxu0
      %v811 = vpop.f32.mrf.mxu0
      %v812 = vadd.f32 0.0, %v811
      %v813 = vpop.f32.mrf.mxu0
      %814 = vmatprep.mubr.bf16.mxu0 0
      %815 = vmatmul.mubr.bf16.gmra.mxu0 %v548
      %v816 = vpop.f32.mrf.mxu0
      %v817 = vadd.f32 0.0, %v816
      %v818 = vpop.f32.mrf.mxu0
      %v819 = vpop.f32.mrf.mxu0
      %v820 = vadd.f32 0.0, %v819
      %v821 = vpop.f32.mrf.mxu0
      %822 = vmatprep.mubr.bf16.mxu0 0
      %823 = vmatmul.mubr.bf16.gmra.mxu0 %v551
      %v824 = vpop.f32.mrf.mxu0
      %v825 = vadd.f32 0.0, %v824
      %v826 = vpop.f32.mrf.mxu0
      %v827 = vpop.f32.mrf.mxu0
      %v828 = vadd.f32 0.0, %v827
      %v829 = vpop.f32.mrf.mxu0
      %830 = vmatprep.mubr.bf16.mxu0 0
      %831 = vmatmul.mubr.bf16.gmra.mxu0 %v554
      %v832 = vpop.f32.mrf.mxu0
      %v833 = vadd.f32 0.0, %v832
      %v834 = vpop.f32.mrf.mxu0
      %v835 = vpop.f32.mrf.mxu0
      %v836 = vadd.f32 0.0, %v835
      %v837 = vpop.f32.mrf.mxu0
      %838 = vmatprep.mubr.bf16.mxu0 0
      %839 = vmatmul.mubr.bf16.gmra.mxu0 %v557
      %v840 = vpop.f32.mrf.mxu0
      %v841 = vadd.f32 0.0, %v840
      %v842 = vpop.f32.mrf.mxu0
      %v843 = vpop.f32.mrf.mxu0
      %v844 = vadd.f32 0.0, %v843
      %v845 = vpop.f32.mrf.mxu0
      %846 = vmatprep.mubr.bf16.mxu0 0
      %847 = vmatmul.mubr.bf16.gmra.mxu0 %v560
      %v848 = vpop.f32.mrf.mxu0
      %v849 = vadd.f32 0.0, %v848
      %v850 = vpop.f32.mrf.mxu0
      %v851 = vpop.f32.mrf.mxu0
      %v852 = vadd.f32 0.0, %v851
      %v853 = vpop.f32.mrf.mxu0
      %854 = vdwg.mxu0
      %vm855 = vcmask 64512
      %856 = vst.msk [vmem:[%s179] sm:$0xff] %vm855, %v601
      %857 = vst.msk [vmem:[%s179 + $0x8] sm:$0xff] %vm855, %v604
      %858 = vst.msk [vmem:[%s179 + $0x10] sm:$0xff] %vm855, %v609
      %859 = vst.msk [vmem:[%s179 + $0x18] sm:$0xff] %vm855, %v612
      %860 = vst.msk [vmem:[%s179 + $0x20] sm:$0xff] %vm855, %v617
      %861 = vst.msk [vmem:[%s179 + $0x28] sm:$0xff] %vm855, %v620
      %862 = vst.msk [vmem:[%s179 + $0x30] sm:$0xff] %vm855, %v625
      %863 = vst.msk [vmem:[%s179 + $0x38] sm:$0xff] %vm855, %v628
      %864 = vst.msk [vmem:[%s179 + $0x40] sm:$0xff] %vm855, %v633
      %865 = vst.msk [vmem:[%s179 + $0x48] sm:$0xff] %vm855, %v636
      %866 = vst.msk [vmem:[%s179 + $0x50] sm:$0xff] %vm855, %v641
      %867 = vst.msk [vmem:[%s179 + $0x58] sm:$0xff] %vm855, %v644
      %868 = vst.msk [vmem:[%s179 + $0x60] sm:$0xff] %vm855, %v649
      %869 = vst.msk [vmem:[%s179 + $0x68] sm:$0xff] %vm855, %v652
      %870 = vst.msk [vmem:[%s179 + $0x70] sm:$0xff] %vm855, %v657
      %871 = vst.msk [vmem:[%s179 + $0x78] sm:$0xff] %vm855, %v660
      %872 = vst.msk [vmem:[%s179 + $0x80] sm:$0xff] %vm855, %v665
      %873 = vst.msk [vmem:[%s179 + $0x88] sm:$0xff] %vm855, %v668
      %874 = vst.msk [vmem:[%s179 + $0x90] sm:$0xff] %vm855, %v673
      %875 = vst.msk [vmem:[%s179 + $0x98] sm:$0xff] %vm855, %v676
      %876 = vst.msk [vmem:[%s179 + $0xa0] sm:$0xff] %vm855, %v681
      %877 = vst.msk [vmem:[%s179 + $0xa8] sm:$0xff] %vm855, %v684
      %878 = vst.msk [vmem:[%s179 + $0xb0] sm:$0xff] %vm855, %v689
      %879 = vst.msk [vmem:[%s179 + $0xb8] sm:$0xff] %vm855, %v692
      %880 = vst.msk [vmem:[%s179 + $0xc0] sm:$0xff] %vm855, %v697
      %881 = vst.msk [vmem:[%s179 + $0xc8] sm:$0xff] %vm855, %v700
      %882 = vst.msk [vmem:[%s179 + $0xd0] sm:$0xff] %vm855, %v705
      %883 = vst.msk [vmem:[%s179 + $0xd8] sm:$0xff] %vm855, %v708
      %884 = vst.msk [vmem:[%s179 + $0xe0] sm:$0xff] %vm855, %v713
      %885 = vst.msk [vmem:[%s179 + $0xe8] sm:$0xff] %vm855, %v716
      %886 = vst.msk [vmem:[%s179 + $0xf0] sm:$0xff] %vm855, %v721
      %887 = vst.msk [vmem:[%s179 + $0xf8] sm:$0xff] %vm855, %v724
      %888 = vst.msk [vmem:[%s179 + $0x100] sm:$0xff] %vm855, %v729
      %889 = vst.msk [vmem:[%s179 + $0x108] sm:$0xff] %vm855, %v732
      %890 = vst.msk [vmem:[%s179 + $0x110] sm:$0xff] %vm855, %v737
      %891 = vst.msk [vmem:[%s179 + $0x118] sm:$0xff] %vm855, %v740
      %892 = vst.msk [vmem:[%s179 + $0x120] sm:$0xff] %vm855, %v745
      %893 = vst.msk [vmem:[%s179 + $0x128] sm:$0xff] %vm855, %v748
      %894 = vst.msk [vmem:[%s179 + $0x130] sm:$0xff] %vm855, %v753
      %895 = vst.msk [vmem:[%s179 + $0x138] sm:$0xff] %vm855, %v756
      %896 = vst.msk [vmem:[%s179 + $0x140] sm:$0xff] %vm855, %v761
      %897 = vst.msk [vmem:[%s179 + $0x148] sm:$0xff] %vm855, %v764
      %898 = vst.msk [vmem:[%s179 + $0x150] sm:$0xff] %vm855, %v769
      %899 = vst.msk [vmem:[%s179 + $0x158] sm:$0xff] %vm855, %v772
      %900 = vst.msk [vmem:[%s179 + $0x160] sm:$0xff] %vm855, %v777
      %901 = vst.msk [vmem:[%s179 + $0x168] sm:$0xff] %vm855, %v780
      %902 = vst.msk [vmem:[%s179 + $0x170] sm:$0xff] %vm855, %v785
      %903 = vst.msk [vmem:[%s179 + $0x178] sm:$0xff] %vm855, %v788
      %904 = vst.msk [vmem:[%s179 + $0x180] sm:$0xff] %vm855, %v793
      %905 = vst.msk [vmem:[%s179 + $0x188] sm:$0xff] %vm855, %v796
      %906 = vst.msk [vmem:[%s179 + $0x190] sm:$0xff] %vm855, %v801
      %907 = vst.msk [vmem:[%s179 + $0x198] sm:$0xff] %vm855, %v804
      %908 = vst.msk [vmem:[%s179 + $0x1a0] sm:$0xff] %vm855, %v809
      %909 = vst.msk [vmem:[%s179 + $0x1a8] sm:$0xff] %vm855, %v812
      %910 = vst.msk [vmem:[%s179 + $0x1b0] sm:$0xff] %vm855, %v817
      %911 = vst.msk [vmem:[%s179 + $0x1b8] sm:$0xff] %vm855, %v820
      %912 = vst.msk [vmem:[%s179 + $0x1c0] sm:$0xff] %vm855, %v825
      %913 = vst.msk [vmem:[%s179 + $0x1c8] sm:$0xff] %vm855, %v828
      %914 = vst.msk [vmem:[%s179 + $0x1d0] sm:$0xff] %vm855, %v833
      %915 = vst.msk [vmem:[%s179 + $0x1d8] sm:$0xff] %vm855, %v836
      %916 = vst.msk [vmem:[%s179 + $0x1e0] sm:$0xff] %vm855, %v841
      %917 = vst.msk [vmem:[%s179 + $0x1e8] sm:$0xff] %vm855, %v844
      %918 = vst.msk [vmem:[%s179 + $0x1f0] sm:$0xff] %vm855, %v849
      %919 = vst.msk [vmem:[%s179 + $0x1f8] sm:$0xff] %vm855, %v852
      %920 = vmatprep.subr.mxu0 0.0
      %921 = vmatpush1.msra.mxu0 %v660
      %922 = vmatprep.subr.mxu0 0.0
      %923 = vmatpush1.msra.mxu0 %v657
      %924 = vmatprep.subr.mxu0 0.0
      %925 = vmatpush1.msra.mxu0 %v652
      %926 = vmatprep.subr.mxu0 0.0
      %927 = vmatpush1.msra.mxu0 %v649
      %928 = vmatprep.subr.mxu0 0.0
      %929 = vmatpush1.msra.mxu0 %v644
      %930 = vmatprep.subr.mxu0 0.0
      %931 = vmatpush1.msra.mxu0 %v641
      %932 = vmatprep.subr.mxu0 0.0
      %933 = vmatpush1.msra.mxu0 %v636
      %934 = vmatprep.subr.mxu0 0.0
      %935 = vmatpush1.msra.mxu0 %v633
      %936 = vmatprep.subr.mxu0 0.0
      %937 = vmatpush1.msra.mxu0 %v628
      %938 = vmatprep.subr.mxu0 0.0
      %939 = vmatpush1.msra.mxu0 %v625
      %940 = vmatprep.subr.mxu0 0.0
      %941 = vmatpush1.msra.mxu0 %v620
      %942 = vmatprep.subr.mxu0 0.0
      %943 = vmatpush1.msra.mxu0 %v617
      %944 = vmatprep.subr.mxu0 0.0
      %945 = vmatpush1.msra.mxu0 %v612
      %946 = vmatprep.subr.mxu0 0.0
      %947 = vmatpush1.msra.mxu0 %v609
      %948 = vmatprep.subr.mxu0 0.0
      %949 = vmatpush1.msra.mxu0 %v604
      %950 = vmatprep.subr.mxu0 0.0
      %951 = vmatpush1.msra.mxu0 %v601
      %952 = vmatprep.subr.mxu0 0.0
      %953 = vmatpush2.msra.mxu0 %v724
      %954 = vmatprep.subr.mxu0 0.0
      %955 = vmatpush2.msra.mxu0 %v721
      %956 = vmatprep.subr.mxu0 0.0
      %957 = vmatpush2.msra.mxu0 %v716
      %958 = vmatprep.subr.mxu0 0.0
      %959 = vmatpush2.msra.mxu0 %v713
      %960 = vmatprep.subr.mxu0 0.0
      %961 = vmatpush2.msra.mxu0 %v708
      %962 = vmatprep.subr.mxu0 0.0
      %963 = vmatpush2.msra.mxu0 %v705
      %964 = vmatprep.subr.mxu0 0.0
      %965 = vmatpush2.msra.mxu0 %v700
      %966 = vmatprep.subr.mxu0 0.0
      %967 = vmatpush2.msra.mxu0 %v697
      %968 = vmatprep.subr.mxu0 0.0
      %969 = vmatpush2.msra.mxu0 %v692
      %970 = vmatprep.subr.mxu0 0.0
      %971 = vmatpush2.msra.mxu0 %v689
      %972 = vmatprep.subr.mxu0 0.0
      %973 = vmatpush2.msra.mxu0 %v684
      %974 = vmatprep.subr.mxu0 0.0
      %975 = vmatpush2.msra.mxu0 %v681
      %976 = vmatprep.subr.mxu0 0.0
      %977 = vmatpush2.msra.mxu0 %v676
      %978 = vmatprep.subr.mxu0 0.0
      %979 = vmatpush2.msra.mxu0 %v673
      %980 = vmatprep.subr.mxu0 0.0
      %981 = vmatpush2.msra.mxu0 %v668
      %982 = vmatprep.subr.mxu0 0.0
      %983 = vmatpush2.msra.mxu0 %v665
      %984 = vmatprep.mubr.f32.mxu0 1.0
      %985 = vmatmul.mubr.f32.gmra.mxu0 1.0
      %v986 = vpop.f32.mrf.mxu0
      %v987 = vadd.f32 0.0, %v986
      %v988 = vpop.f32.mrf.mxu0
      %989 = vdwg.mxu0
      %990 = vmatprep.subr.mxu0 0.0
      %991 = vmatpush1.msra.mxu0 %v788
      %992 = vmatprep.subr.mxu0 0.0
      %993 = vmatpush1.msra.mxu0 %v785
      %994 = vmatprep.subr.mxu0 0.0
      %995 = vmatpush1.msra.mxu0 %v780
      %996 = vmatprep.subr.mxu0 0.0
      %997 = vmatpush1.msra.mxu0 %v777
      %998 = vmatprep.subr.mxu0 0.0
      %999 = vmatpush1.msra.mxu0 %v772
      %1000 = vmatprep.subr.mxu0 0.0
      %1001 = vmatpush1.msra.mxu0 %v769
      %1002 = vmatprep.subr.mxu0 0.0
      %1003 = vmatpush1.msra.mxu0 %v764
      %1004 = vmatprep.subr.mxu0 0.0
      %1005 = vmatpush1.msra.mxu0 %v761
      %1006 = vmatprep.subr.mxu0 0.0
      %1007 = vmatpush1.msra.mxu0 %v756
      %1008 = vmatprep.subr.mxu0 0.0
      %1009 = vmatpush1.msra.mxu0 %v753
      %1010 = vmatprep.subr.mxu0 0.0
      %1011 = vmatpush1.msra.mxu0 %v748
      %1012 = vmatprep.subr.mxu0 0.0
      %1013 = vmatpush1.msra.mxu0 %v745
      %1014 = vmatprep.subr.mxu0 0.0
      %1015 = vmatpush1.msra.mxu0 %v740
      %1016 = vmatprep.subr.mxu0 0.0
      %1017 = vmatpush1.msra.mxu0 %v737
      %1018 = vmatprep.subr.mxu0 0.0
      %1019 = vmatpush1.msra.mxu0 %v732
      %1020 = vmatprep.subr.mxu0 0.0
      %1021 = vmatpush1.msra.mxu0 %v729
      %1022 = vmatprep.subr.mxu0 0.0
      %1023 = vmatpush2.msra.mxu0 %v852
      %1024 = vmatprep.subr.mxu0 0.0
      %1025 = vmatpush2.msra.mxu0 %v849
      %1026 = vmatprep.subr.mxu0 0.0
      %1027 = vmatpush2.msra.mxu0 %v844
      %1028 = vmatprep.subr.mxu0 0.0
      %1029 = vmatpush2.msra.mxu0 %v841
      %1030 = vmatprep.subr.mxu0 0.0
      %1031 = vmatpush2.msra.mxu0 %v836
      %1032 = vmatprep.subr.mxu0 0.0
      %1033 = vmatpush2.msra.mxu0 %v833
      %1034 = vmatprep.subr.mxu0 0.0
      %1035 = vmatpush2.msra.mxu0 %v828
      %1036 = vmatprep.subr.mxu0 0.0
      %1037 = vmatpush2.msra.mxu0 %v825
      %1038 = vmatprep.subr.mxu0 0.0
      %1039 = vmatpush2.msra.mxu0 %v820
      %1040 = vmatprep.subr.mxu0 0.0
      %1041 = vmatpush2.msra.mxu0 %v817
      %1042 = vmatprep.subr.mxu0 0.0
      %1043 = vmatpush2.msra.mxu0 %v812
      %1044 = vmatprep.subr.mxu0 0.0
      %1045 = vmatpush2.msra.mxu0 %v809
      %1046 = vmatprep.subr.mxu0 0.0
      %1047 = vmatpush2.msra.mxu0 %v804
      %1048 = vmatprep.subr.mxu0 0.0
      %1049 = vmatpush2.msra.mxu0 %v801
      %1050 = vmatprep.subr.mxu0 0.0
      %1051 = vmatpush2.msra.mxu0 %v796
      %1052 = vmatprep.subr.mxu0 0.0
      %1053 = vmatpush2.msra.mxu0 %v793
      %1054 = vmatprep.mubr.f32.mxu0 1.0
      %1055 = vmatmul.mubr.f32.gmra.mxu0 1.0
      %v1056 = vpop.f32.mrf.mxu0
      %v1057 = vadd.f32 %v987, %v1056
      %v1058 = vpop.f32.mrf.mxu0
      %1059 = vdwg.mxu0
      %v1060 = vmul.f32 %v601, %v601
      %v1061 = vmul.f32 %v604, %v604
      %v1062 = vmul.f32 %v609, %v609
      %v1063 = vmul.f32 %v612, %v612
      %v1064 = vmul.f32 %v617, %v617
      %v1065 = vmul.f32 %v620, %v620
      %v1066 = vmul.f32 %v625, %v625
      %v1067 = vmul.f32 %v628, %v628
      %v1068 = vmul.f32 %v633, %v633
      %v1069 = vmul.f32 %v636, %v636
      %v1070 = vmul.f32 %v641, %v641
      %v1071 = vmul.f32 %v644, %v644
      %v1072 = vmul.f32 %v649, %v649
      %v1073 = vmul.f32 %v652, %v652
      %v1074 = vmul.f32 %v657, %v657
      %v1075 = vmul.f32 %v660, %v660
      %v1076 = vmul.f32 %v665, %v665
      %v1077 = vmul.f32 %v668, %v668
      %v1078 = vmul.f32 %v673, %v673
      %v1079 = vmul.f32 %v676, %v676
      %v1080 = vmul.f32 %v681, %v681
      %v1081 = vmul.f32 %v684, %v684
      %v1082 = vmul.f32 %v689, %v689
      %v1083 = vmul.f32 %v692, %v692
      %v1084 = vmul.f32 %v697, %v697
      %v1085 = vmul.f32 %v700, %v700
      %v1086 = vmul.f32 %v705, %v705
      %v1087 = vmul.f32 %v708, %v708
      %v1088 = vmul.f32 %v713, %v713
      %v1089 = vmul.f32 %v716, %v716
      %v1090 = vmul.f32 %v721, %v721
      %v1091 = vmul.f32 %v724, %v724
      %v1092 = vmul.f32 %v729, %v729
      %v1093 = vmul.f32 %v732, %v732
      %v1094 = vmul.f32 %v737, %v737
      %v1095 = vmul.f32 %v740, %v740
      %v1096 = vmul.f32 %v745, %v745
      %v1097 = vmul.f32 %v748, %v748
      %v1098 = vmul.f32 %v753, %v753
      %v1099 = vmul.f32 %v756, %v756
      %v1100 = vmul.f32 %v761, %v761
      %v1101 = vmul.f32 %v764, %v764
      %v1102 = vmul.f32 %v769, %v769
      %v1103 = vmul.f32 %v772, %v772
      %v1104 = vmul.f32 %v777, %v777
      %v1105 = vmul.f32 %v780, %v780
      %v1106 = vmul.f32 %v785, %v785
      %v1107 = vmul.f32 %v788, %v788
      %v1108 = vmul.f32 %v793, %v793
      %v1109 = vmul.f32 %v796, %v796
      %v1110 = vmul.f32 %v801, %v801
      %v1111 = vmul.f32 %v804, %v804
      %v1112 = vmul.f32 %v809, %v809
      %v1113 = vmul.f32 %v812, %v812
      %v1114 = vmul.f32 %v817, %v817
      %v1115 = vmul.f32 %v820, %v820
      %v1116 = vmul.f32 %v825, %v825
      %v1117 = vmul.f32 %v828, %v828
      %v1118 = vmul.f32 %v833, %v833
      %v1119 = vmul.f32 %v836, %v836
      %v1120 = vmul.f32 %v841, %v841
      %v1121 = vmul.f32 %v844, %v844
      %v1122 = vmul.f32 %v849, %v849
      %v1123 = vmul.f32 %v852, %v852
      %1124 = vmatprep.subr.mxu0 0.0
      %1125 = vmatpush1.msra.mxu0 %v1075
      %1126 = vmatprep.subr.mxu0 0.0
      %1127 = vmatpush1.msra.mxu0 %v1074
      %1128 = vmatprep.subr.mxu0 0.0
      %1129 = vmatpush1.msra.mxu0 %v1073
      %1130 = vmatprep.subr.mxu0 0.0
      %1131 = vmatpush1.msra.mxu0 %v1072
      %1132 = vmatprep.subr.mxu0 0.0
      %1133 = vmatpush1.msra.mxu0 %v1071
      %1134 = vmatprep.subr.mxu0 0.0
      %1135 = vmatpush1.msra.mxu0 %v1070
      %1136 = vmatprep.subr.mxu0 0.0
      %1137 = vmatpush1.msra.mxu0 %v1069
      %1138 = vmatprep.subr.mxu0 0.0
      %1139 = vmatpush1.msra.mxu0 %v1068
      %1140 = vmatprep.subr.mxu0 0.0
      %1141 = vmatpush1.msra.mxu0 %v1067
      %1142 = vmatprep.subr.mxu0 0.0
      %1143 = vmatpush1.msra.mxu0 %v1066
      %1144 = vmatprep.subr.mxu0 0.0
      %1145 = vmatpush1.msra.mxu0 %v1065
      %1146 = vmatprep.subr.mxu0 0.0
      %1147 = vmatpush1.msra.mxu0 %v1064
      %1148 = vmatprep.subr.mxu0 0.0
      %1149 = vmatpush1.msra.mxu0 %v1063
      %1150 = vmatprep.subr.mxu0 0.0
      %1151 = vmatpush1.msra.mxu0 %v1062
      %1152 = vmatprep.subr.mxu0 0.0
      %1153 = vmatpush1.msra.mxu0 %v1061
      %1154 = vmatprep.subr.mxu0 0.0
      %1155 = vmatpush1.msra.mxu0 %v1060
      %1156 = vmatprep.subr.mxu0 0.0
      %1157 = vmatpush2.msra.mxu0 %v1091
      %1158 = vmatprep.subr.mxu0 0.0
      %1159 = vmatpush2.msra.mxu0 %v1090
      %1160 = vmatprep.subr.mxu0 0.0
      %1161 = vmatpush2.msra.mxu0 %v1089
      %1162 = vmatprep.subr.mxu0 0.0
      %1163 = vmatpush2.msra.mxu0 %v1088
      %1164 = vmatprep.subr.mxu0 0.0
      %1165 = vmatpush2.msra.mxu0 %v1087
      %1166 = vmatprep.subr.mxu0 0.0
      %1167 = vmatpush2.msra.mxu0 %v1086
      %1168 = vmatprep.subr.mxu0 0.0
      %1169 = vmatpush2.msra.mxu0 %v1085
      %1170 = vmatprep.subr.mxu0 0.0
      %1171 = vmatpush2.msra.mxu0 %v1084
      %1172 = vmatprep.subr.mxu0 0.0
      %1173 = vmatpush2.msra.mxu0 %v1083
      %1174 = vmatprep.subr.mxu0 0.0
      %1175 = vmatpush2.msra.mxu0 %v1082
      %1176 = vmatprep.subr.mxu0 0.0
      %1177 = vmatpush2.msra.mxu0 %v1081
      %1178 = vmatprep.subr.mxu0 0.0
      %1179 = vmatpush2.msra.mxu0 %v1080
      %1180 = vmatprep.subr.mxu0 0.0
      %1181 = vmatpush2.msra.mxu0 %v1079
      %1182 = vmatprep.subr.mxu0 0.0
      %1183 = vmatpush2.msra.mxu0 %v1078
      %1184 = vmatprep.subr.mxu0 0.0
      %1185 = vmatpush2.msra.mxu0 %v1077
      %1186 = vmatprep.subr.mxu0 0.0
      %1187 = vmatpush2.msra.mxu0 %v1076
      %1188 = vmatprep.mubr.f32.mxu0 1.0
      %1189 = vmatmul.mubr.f32.gmra.mxu0 1.0
      %v1190 = vpop.f32.mrf.mxu0
      %v1191 = vadd.f32 0.0, %v1190
      %v1192 = vpop.f32.mrf.mxu0
      %1193 = vdwg.mxu0
      %1194 = vmatprep.subr.mxu0 0.0
      %1195 = vmatpush1.msra.mxu0 %v1107
      %1196 = vmatprep.subr.mxu0 0.0
      %1197 = vmatpush1.msra.mxu0 %v1106
      %1198 = vmatprep.subr.mxu0 0.0
      %1199 = vmatpush1.msra.mxu0 %v1105
      %1200 = vmatprep.subr.mxu0 0.0
      %1201 = vmatpush1.msra.mxu0 %v1104
      %1202 = vmatprep.subr.mxu0 0.0
      %1203 = vmatpush1.msra.mxu0 %v1103
      %1204 = vmatprep.subr.mxu0 0.0
      %1205 = vmatpush1.msra.mxu0 %v1102
      %1206 = vmatprep.subr.mxu0 0.0
      %1207 = vmatpush1.msra.mxu0 %v1101
      %1208 = vmatprep.subr.mxu0 0.0
      %1209 = vmatpush1.msra.mxu0 %v1100
      %1210 = vmatprep.subr.mxu0 0.0
      %1211 = vmatpush1.msra.mxu0 %v1099
      %1212 = vmatprep.subr.mxu0 0.0
      %1213 = vmatpush1.msra.mxu0 %v1098
      %1214 = vmatprep.subr.mxu0 0.0
      %1215 = vmatpush1.msra.mxu0 %v1097
      %1216 = vmatprep.subr.mxu0 0.0
      %1217 = vmatpush1.msra.mxu0 %v1096
      %1218 = vmatprep.subr.mxu0 0.0
      %1219 = vmatpush1.msra.mxu0 %v1095
      %1220 = vmatprep.subr.mxu0 0.0
      %1221 = vmatpush1.msra.mxu0 %v1094
      %1222 = vmatprep.subr.mxu0 0.0
      %1223 = vmatpush1.msra.mxu0 %v1093
      %1224 = vmatprep.subr.mxu0 0.0
      %1225 = vmatpush1.msra.mxu0 %v1092
      %1226 = vmatprep.subr.mxu0 0.0
      %1227 = vmatpush2.msra.mxu0 %v1123
      %1228 = vmatprep.subr.mxu0 0.0
      %1229 = vmatpush2.msra.mxu0 %v1122
      %1230 = vmatprep.subr.mxu0 0.0
      %1231 = vmatpush2.msra.mxu0 %v1121
      %1232 = vmatprep.subr.mxu0 0.0
      %1233 = vmatpush2.msra.mxu0 %v1120
      %1234 = vmatprep.subr.mxu0 0.0
      %1235 = vmatpush2.msra.mxu0 %v1119
      %1236 = vmatprep.subr.mxu0 0.0
      %1237 = vmatpush2.msra.mxu0 %v1118
      %1238 = vmatprep.subr.mxu0 0.0
      %1239 = vmatpush2.msra.mxu0 %v1117
      %1240 = vmatprep.subr.mxu0 0.0
      %1241 = vmatpush2.msra.mxu0 %v1116
      %1242 = vmatprep.subr.mxu0 0.0
      %1243 = vmatpush2.msra.mxu0 %v1115
      %1244 = vmatprep.subr.mxu0 0.0
      %1245 = vmatpush2.msra.mxu0 %v1114
      %1246 = vmatprep.subr.mxu0 0.0
      %1247 = vmatpush2.msra.mxu0 %v1113
      %1248 = vmatprep.subr.mxu0 0.0
      %1249 = vmatpush2.msra.mxu0 %v1112
      %1250 = vmatprep.subr.mxu0 0.0
      %1251 = vmatpush2.msra.mxu0 %v1111
      %1252 = vmatprep.subr.mxu0 0.0
      %1253 = vmatpush2.msra.mxu0 %v1110
      %1254 = vmatprep.subr.mxu0 0.0
      %1255 = vmatpush2.msra.mxu0 %v1109
      %1256 = vmatprep.subr.mxu0 0.0
      %1257 = vmatpush2.msra.mxu0 %v1108
      %1258 = vmatprep.mubr.f32.mxu0 1.0
      %1259 = vmatmul.mubr.f32.gmra.mxu0 1.0
      %v1260 = vpop.f32.mrf.mxu0
      %v1261 = vadd.f32 %v1191, %v1260
      %v1262 = vpop.f32.mrf.mxu0
      %1263 = vdwg.mxu0
      %v1265 = vrot.slane %v1261, 7
      %vm1267 = vcmask 1040384
      %v1268 = vsel %vm1267, %v1057, %v1265
      %vm1269 = vcmask 58368
      %1270 = vst.msk [vmem:[%s184] sm:$0x3] %vm1269, %v1268
      %s1271 = smul.u32 64, %s15
      %p1272 = scmp.lt.s32.totalorder %s1271, 127
      %s1273 = scalar_select %p1272, %s1271, 127
      %s1274 = smul.addr %s1273, 8
      %s1275 = scalar_lea.vmem %s2, %s1274
      %p1276 = scmp.lt.s32.totalorder %s15, 1
      %s1277 = scalar_select %p1276, %s15, 1
      %s1278 = smul.addr %s1277, 2
      %s1279 = scalar_lea.vmem %s3, %s1278
      // Predicated region
      $region29: #{conv_bn_relu.2} parent=27 // pred_check
        %p1280 = pneg %p80
      $region30: #{conv_bn_relu.2} parent=27 // pred_check_branch
        %1282 = sbr.rel (%p1280) target = $region32
      $region31: #{conv_bn_relu.2} parent=27 // pred_region
        %s1283 = smul.u32 64, %s15
      $region32: #{conv_bn_relu.2} parent=27 // pred_fallthru
        _
      // Predicated region
      $region33: #{conv_bn_relu.2} parent=27 // pred_check
        %p1284 = pneg %p106
      $region34: #{conv_bn_relu.2} parent=27 // pred_check_branch
        %1286 = sbr.rel (%p1284) target = $region36
      $region35: #{conv_bn_relu.2} parent=27 // pred_region
        _
      $region36: #{conv_bn_relu.2} parent=27 // pred_fallthru
        _
    $region28: #{conv_bn_relu.2} parent=5 // pred_fallthru
      _
    %p1287 = scmp.le.s32.totalorder 2, %s10
    // Predicated region
    $region37: #{conv_bn_relu.2} parent=5 // pred_check
      %p1288 = pneg %p1287
    $region38: #{conv_bn_relu.2} parent=5 // pred_check_branch
      %1290 = sbr.rel (%p1288) target = $region40
    $region39: #{conv_bn_relu.2} parent=5 // pred_region
      %s1291 = ssub.s32 %s10, 2
      // Predicated region
      $region41: #{conv_bn_relu.2} parent=39 // pred_check
        %p1292 = pneg %p86
      $region42: #{conv_bn_relu.2} parent=39 // pred_check_branch
        %1294 = sbr.rel (%p1292) target = $region44
      $region43: #{conv_bn_relu.2} parent=39 // pred_region
        %s1295 = smul.u32 64, %s16
        %p1296 = scmp.lt.s32.totalorder %s1295, 127
        %s1297 = scalar_select %p1296, %s1295, 127
        %s1298 = smul.addr %s1297, 8
        %s1299 = scalar_lea.vmem %s2, %s1298
      $region44: #{conv_bn_relu.2} parent=39 // pred_fallthru
        _
      // Predicated region
      $region45: #{conv_bn_relu.2} parent=39 // pred_check
        %p1300 = pneg %p112
      $region46: #{conv_bn_relu.2} parent=39 // pred_check_branch
        %1302 = sbr.rel (%p1300) target = $region48
      $region47: #{conv_bn_relu.2} parent=39 // pred_region
        %p1303 = scmp.lt.s32.totalorder %s16, 1
        %s1304 = scalar_select %p1303, %s16, 1
        %s1305 = smul.addr %s1304, 2
        %s1306 = scalar_lea.vmem %s3, %s1305
      $region48: #{conv_bn_relu.2} parent=39 // pred_fallthru
        _
    $region40: #{conv_bn_relu.2} parent=5 // pred_fallthru
      _
  $region6: #{conv_bn_relu.2} parent=0 // loop_footer
    %s14 = sadd.s32 1, %s10
  $region7: #{conv_bn_relu.2} parent=0 // loop_footer_branch
    %9 = sbr.rel target = $region3
  $region8: #{conv_bn_relu.2} parent=0 // loop_exit
    _

</llo_original>
